<compile_context>
chip_gen: v6e
topology: v6e:2x2x1
jax: 0.10.0
libtpu: 0.0.40
codegen_flags: <defaults>
</compile_context>

<pallas_src>
import math
import functools

import jax
import jax.numpy as jnp
from jax.experimental import pallas as pl
from jax.experimental.pallas import tpu as pltpu


# ----------------------------------------------------------------------------
# Pallas kernel: multi-head attention for a tile of Bt inner-batch rows.
# ----------------------------------------------------------------------------
def _mha_kernel(q_ref, k_ref, v_ref,
                wq_ref, wk_ref, wv_ref, wo_ref,
                bq_ref, bk_ref, bv_ref, bo_ref,
                out_ref, *rest,
                nhead, head_dim, need_weights):
    if need_weights:
        attn_ref, o_scratch = rest
    else:
        (o_scratch,) = rest
        attn_ref = None

    Bt, L, E = q_ref.shape          # (Bt, L, E_in); refs are already bf16
    S = k_ref.shape[1]

    # ---- input projections: (Bt*T, E) @ (E, E) bf16 on the MXU, f32 accumulation.
    q2 = q_ref[...].reshape(Bt * L, E)
    k2 = k_ref[...].reshape(Bt * S, E)
    v2 = v_ref[...].reshape(Bt * S, E)

    # 1/sqrt(head_dim) is already folded into wq/bq by the wrapper.
    qp = (jnp.dot(q2, wq_ref[...], preferred_element_type=jnp.float32)
          + bq_ref[0]).reshape(Bt, L, E).astype(jnp.bfloat16)
    kp = (jnp.dot(k2, wk_ref[...], preferred_element_type=jnp.float32)
          + bk_ref[0]).reshape(Bt, S, E).astype(jnp.bfloat16)
    vp = (jnp.dot(v2, wv_ref[...], preferred_element_type=jnp.float32)
          + bv_ref[0]).reshape(Bt, S, E).astype(jnp.bfloat16)

    inv_h = 1.0 / nhead

    # static loop over heads (compile-time constant, small); per-head work is
    # batched over the Bt rows of this grid step.
    for h in range(nhead):
        lo = h * head_dim
        hi = lo + head_dim
        qh = qp[:, :, lo:hi]                       # (Bt, L, D) bf16 (scale pre-folded)
        kh = kp[:, :, lo:hi]                       # (Bt, S, D) bf16
        vh = vp[:, :, lo:hi]                       # (Bt, S, D) bf16

        s = jnp.einsum('bld,bsd->bls', qh, kh,
                       preferred_element_type=jnp.float32)        # (Bt, L, S) f32
        s = s - jnp.max(s, axis=-1, keepdims=True)
        e = jnp.exp(s)
        # one exact normalization (torch parity: rows sum to 1); reciprocal of the
        # (Bt, L, 1) denominator is negligible next to the (Bt, L, S) multiply.
        p = e * pl.reciprocal(jnp.sum(e, axis=-1, keepdims=True), approx=False)

        if need_weights:
            # head-average accumulated directly in the VMEM-resident output tile
            if h == 0:
                attn_ref[...] = (p * inv_h).astype(attn_ref.dtype)
            else:
                attn_ref[...] += (p * inv_h).astype(attn_ref.dtype)

        # write this head's PV result straight into its bf16 output slice
        o_scratch[:, :, lo:hi] = jnp.einsum(
            'bls,bsd->bld', p.astype(jnp.bfloat16), vh,
            preferred_element_type=jnp.float32).astype(o_scratch.dtype)

    # ---- output projection (full width K=E, full MXU utilization)
    o2 = o_scratch[...].reshape(Bt * L, E)
    out = jnp.dot(o2, wo_ref[...], preferred_element_type=jnp.float32) + bo_ref[0]
    out_ref[...] = out.reshape(Bt, L, E).astype(out_ref.dtype)


# ----------------------------------------------------------------------------
# Wrapper: reshapes exactly like the torch module (batch-first inputs (N, L, E)).
# ----------------------------------------------------------------------------
def multihead_attention_forward(query, key, value, params, *, nhead, nb=1,
                                block_b=None, need_weights=True):
    """
    query: (N, L, E), key/value: (N, S, E).
    Returns (output: (N, L, E), attn_weights: (N*nb, L, S) or None).
    """
    # TODO(synk): attn_mask / key_padding_mask / dropout>0 / add_bias_kv / add_zero_attn
    #             not implemented (module defaults assumed).
    N, L, E = query.shape
    S = key.shape[1]
    E_in = E // nb
    H_in = nhead // nb
    head_dim = E_in // H_in
    B = N * nb

    # (N, T, E) -> (B = N*nb, T, E_in); pure reshape (no transpose) when nb == 1.
    def to_inner(x, T):
        if nb == 1:
            return x
        return (x.reshape(N, T, nb, E_in)
                 .transpose(0, 2, 1, 3)
                 .reshape(B, T, E_in))

    # inputs go to the kernel in bf16 (halves DMA + VMEM; matmuls accumulate in f32)
    q = to_inner(query, L).astype(jnp.bfloat16)
    k = to_inner(key, S).astype(jnp.bfloat16)
    v = to_inner(value, S).astype(jnp.bfloat16)

    # pad L to a multiple of 8 so the (Bt, L, E) -> (Bt*L, E) reshape is layout friendly;
    # padded query rows are computed and sliced off (they never affect real rows).
    L_pad = ((L + 7) // 8) * 8
    if L_pad != L:
        q = jnp.pad(q, ((0, 0), (0, L_pad - L), (0, 0)))

    # batch tile: target >= 256 MXU rows per step (Bt*L), but keep >= 2 grid steps
    # so the "parallel" batch axis can split across v7x's two TensorCores.
    if block_b is None:
        block_b = max(1, -(-256 // L_pad))
    Bt = max(1, min(block_b, B))
    if B >= 2:
        Bt = min(Bt, max(1, B // 2))
    B_pad = ((B + Bt - 1) // Bt) * Bt
    if B_pad != B:
        pad = ((0, B_pad - B), (0, 0), (0, 0))
        q = jnp.pad(q, pad)
        k = jnp.pad(k, pad)
        v = jnp.pad(v, pad)

    wq, wk, wv, wo, bq, bk, bv, bo = params
    scale = 1.0 / math.sqrt(head_dim)
    # fold the softmax scale into the Q projection; weights shipped as bf16,
    # biases stay f32 (added to the f32 accumulators).
    wq_s = (wq * scale).astype(jnp.bfloat16)
    bq_s = (bq * scale).astype(jnp.float32)
    wk_b = wk.astype(jnp.bfloat16)
    wv_b = wv.astype(jnp.bfloat16)
    wo_b = wo.astype(jnp.bfloat16)

    kernel = functools.partial(_mha_kernel, nhead=H_in, head_dim=head_dim,
                               need_weights=need_weights)

    q_spec = pl.BlockSpec((Bt, L_pad, E_in), lambda b: (b, 0, 0))
    kv_spec = pl.BlockSpec((Bt, S, E_in), lambda b: (b, 0, 0))
    # constant index maps: Pallas fetches these blocks once and reuses them
    w_spec = pl.BlockSpec((E_in, E_in), lambda b: (0, 0))
    b_spec = pl.BlockSpec((1, E_in), lambda b: (0, 0))

    out_shapes = [jax.ShapeDtypeStruct((B_pad, L_pad, E_in), query.dtype)]
    out_specs = [pl.BlockSpec((Bt, L_pad, E_in), lambda b: (b, 0, 0))]
    if need_weights:
        out_shapes.append(jax.ShapeDtypeStruct((B_pad, L_pad, S), jnp.float32))
        out_specs.append(pl.BlockSpec((Bt, L_pad, S), lambda b: (b, 0, 0)))

    # derive the scoped-VMEM budget from the chip (v5e/v6e: 128 MiB, v7x: 64 MiB)
    try:
        vmem_limit = int(min(100 * 1024 * 1024,
                             pltpu.get_tpu_info().vmem_capacity_bytes * 3 // 4))
    except Exception:
        vmem_limit = 48 * 1024 * 1024

    result = pl.pallas_call(
        kernel,
        out_shape=tuple(out_shapes),
        grid_spec=pltpu.PrefetchScalarGridSpec(
            num_scalar_prefetch=0,
            grid=(B_pad // Bt,),
            in_specs=[q_spec, kv_spec, kv_spec,
                      w_spec, w_spec, w_spec, w_spec,
                      b_spec, b_spec, b_spec, b_spec],
            out_specs=out_specs,
            scratch_shapes=[pltpu.VMEM((Bt, L_pad, E_in), jnp.bfloat16)],
        ),
        compiler_params=pltpu.CompilerParams(
            dimension_semantics=("parallel",),
            vmem_limit_bytes=vmem_limit,
        ),
    )(q, k, v, wq_s, wk_b, wv_b, wo_b, bq_s, bk, bv, bo)

    if need_weights:
        out, attn = result
        attn = attn[:B, :L]
    else:
        (out,) = result
        attn = None
    out = out[:B, :L]

    # (B, L, E_in) -> (N, L, E); pure reshape when nb == 1.
    if nb == 1:
        output = out
    else:
        output = (out.reshape(N, nb, L, E_in)
                     .transpose(0, 2, 1, 3)
                     .reshape(N, L, E))
    return output, attn


# ----------------------------------------------------------------------------
# Deterministic parameter init (shapes follow nn.MultiheadAttention with
# embed_dim = E//nb, num_heads = nhead//nb, kdim = vdim = embed_dim).
# ----------------------------------------------------------------------------
def make_params(key, E_in):
    ks = jax.random.split(key, 8)
    scale = 1.0 / math.sqrt(E_in)
    # pre-transposed projection weights: y = x @ W + b  (torch uses x @ W.T)
    wq = jax.random.normal(ks[0], (E_in, E_in), jnp.float32) * scale
    wk = jax.random.normal(ks[1], (E_in, E_in), jnp.float32) * scale
    wv = jax.random.normal(ks[2], (E_in, E_in), jnp.float32) * scale
    wo = jax.random.normal(ks[3], (E_in, E_in), jnp.float32) * scale
    bq = jax.random.normal(ks[4], (1, E_in), jnp.float32) * 0.02
    bk = jax.random.normal(ks[5], (1, E_in), jnp.float32) * 0.02
    bv = jax.random.normal(ks[6], (1, E_in), jnp.float32) * 0.02
    bo = jax.random.normal(ks[7], (1, E_in), jnp.float32) * 0.02
    return (wq, wk, wv, wo, bq, bk, bv, bo)


# ----------------------------------------------------------------------------
# Pure-JAX f32 reference (torch semantics) for the correctness check.
# ----------------------------------------------------------------------------
def reference_forward(query, key, value, params, *, nhead, nb=1):
    N, L, E = query.shape
    S = key.shape[1]
    E_in = E // nb
    H_in = nhead // nb
    D = E_in // H_in
    B = N * nb

    def to_inner(x, T):
        return (x.reshape(N, T, nb, E_in).transpose(0, 2, 1, 3).reshape(B, T, E_in))

    q = to_inner(query, L)
    k = to_inner(key, S)
    v = to_inner(value, S)
    wq, wk, wv, wo, bq, bk, bv, bo = params
    qp = q @ wq + bq[0]
    kp = k @ wk + bk[0]
    vp = v @ wv + bv[0]
    qp = qp.reshape(B, L, H_in, D).transpose(0, 2, 1, 3) / math.sqrt(D)
    kp = kp.reshape(B, S, H_in, D).transpose(0, 2, 1, 3)
    vp = vp.reshape(B, S, H_in, D).transpose(0, 2, 1, 3)
    s = jnp.einsum("bhld,bhsd->bhls", qp, kp)
    p = jax.nn.softmax(s, axis=-1)
    o = jnp.einsum("bhls,bhsd->bhld", p, vp)
    o = o.transpose(0, 2, 1, 3).reshape(B, L, E_in)
    o = o @ wo + bo[0]
    attn = p.mean(axis=1)
    output = o.reshape(N, nb, L, E_in).transpose(0, 2, 1, 3).reshape(N, L, E)
    return output, attn


if __name__ == "__main__":
    # small shapes: batch N=2, target seq L=8, source seq S=8, embed E=32, nhead=4, nb=1
    N, L, S, E = 2, 8, 8, 32
    nhead, nb = 4, 1
    E_in = E // nb

    root = jax.random.PRNGKey(0)
    kq, kk, kv, kp = jax.random.split(root, 4)
    query = jax.random.normal(kq, (N, L, E), jnp.float32)
    key = jax.random.normal(kk, (N, S, E), jnp.float32)
    value = jax.random.normal(kv, (N, S, E), jnp.float32)
    params = make_params(kp, E_in)

    # ---- need_weights=True (torch default) ----
    out, attn = multihead_attention_forward(query, key, value, params, nhead=nhead, nb=nb)
    out = jax.block_until_ready(out)
    attn = jax.block_until_ready(attn)

    ref_out, ref_attn = reference_forward(query, key, value, params, nhead=nhead, nb=nb)
    assert out.shape == (N, L, E)
    assert attn.shape == (N * nb, L, S)
    # kernel uses bf16 MXU operands (f32 accumulation) vs. an all-f32 reference,
    # so the tolerance is loosened accordingly.
    assert jnp.allclose(out, ref_out, atol=5e-2, rtol=5e-2), \
        float(jnp.max(jnp.abs(out - ref_out)))
    assert jnp.allclose(attn, ref_attn, atol=5e-2, rtol=5e-2), \
        float(jnp.max(jnp.abs(attn - ref_attn)))

    # ---- need_weights=False path (skips the (B, L, S) attention-weights output) ----
    out2, attn2 = multihead_attention_forward(query, key, value, params,
                                              nhead=nhead, nb=nb, need_weights=False)
    out2 = jax.block_until_ready(out2)
    assert attn2 is None
    assert jnp.allclose(out2, ref_out, atol=5e-2, rtol=5e-2), \
        float(jnp.max(jnp.abs(out2 - ref_out)))

    print("KERNEL_OK")
</pallas_src>

<mosaic_0001>
module attributes {stable_mosaic.version = 11 : i64} {
  func.func @_mha_kernel(%arg0: i32, %arg1: memref<1x8x32xbf16, #tpu.memory_space<vmem>>, %arg2: memref<1x8x32xbf16, #tpu.memory_space<vmem>>, %arg3: memref<1x8x32xbf16, #tpu.memory_space<vmem>>, %arg4: memref<32x32xbf16, #tpu.memory_space<vmem>>, %arg5: memref<32x32xbf16, #tpu.memory_space<vmem>>, %arg6: memref<32x32xbf16, #tpu.memory_space<vmem>>, %arg7: memref<32x32xbf16, #tpu.memory_space<vmem>>, %arg8: memref<1x32xf32, #tpu.memory_space<vmem>>, %arg9: memref<1x32xf32, #tpu.memory_space<vmem>>, %arg10: memref<1x32xf32, #tpu.memory_space<vmem>>, %arg11: memref<1x32xf32, #tpu.memory_space<vmem>>, %arg12: memref<1x8x32xf32, #tpu.memory_space<vmem>>, %arg13: memref<1x8x8xf32, #tpu.memory_space<vmem>>, %arg14: memref<1x8x32xbf16, #tpu.memory_space<vmem>>) attributes {dimension_semantics = [#tpu.dimension_semantics<parallel>], iteration_bounds = array<i64: 2>, scalar_prefetch = 0 : i64, scratch_operands = 1 : i64, tpu.core_type = #tpu.core_type<tc>, window_params = [{transform_indices = @transform_0, window_bounds = array<i64: 1, 8, 32>}, {transform_indices = @transform_1, window_bounds = array<i64: 1, 8, 32>}, {transform_indices = @transform_2, window_bounds = array<i64: 1, 8, 32>}, {pipeline_mode = #tpu.pipeline_mode<synchronous>, transform_indices = @transform_3, window_bounds = array<i64: 32, 32>}, {pipeline_mode = #tpu.pipeline_mode<synchronous>, transform_indices = @transform_4, window_bounds = array<i64: 32, 32>}, {pipeline_mode = #tpu.pipeline_mode<synchronous>, transform_indices = @transform_5, window_bounds = array<i64: 32, 32>}, {pipeline_mode = #tpu.pipeline_mode<synchronous>, transform_indices = @transform_6, window_bounds = array<i64: 32, 32>}, {pipeline_mode = #tpu.pipeline_mode<synchronous>, transform_indices = @transform_7, window_bounds = array<i64: 1, 32>}, {pipeline_mode = #tpu.pipeline_mode<synchronous>, transform_indices = @transform_8, window_bounds = array<i64: 1, 32>}, {pipeline_mode = #tpu.pipeline_mode<synchronous>, transform_indices = @transform_9, window_bounds = array<i64: 1, 32>}, {pipeline_mode = #tpu.pipeline_mode<synchronous>, transform_indices = @transform_10, window_bounds = array<i64: 1, 32>}, {transform_indices = @transform_11, window_bounds = array<i64: 1, 8, 32>}, {transform_indices = @transform_12, window_bounds = array<i64: 1, 8, 8>}]} {
    %c0 = arith.constant 0 : index
    %c0_0 = arith.constant 0 : index
    %c0_1 = arith.constant 0 : index
    %0 = vector.load %arg1[%c0, %c0_0, %c0_1] : memref<1x8x32xbf16, #tpu.memory_space<vmem>>, vector<1x8x32xbf16>
    %1 = vector.shape_cast %0 : vector<1x8x32xbf16> to vector<8x32xbf16>
    %c0_2 = arith.constant 0 : index
    %c0_3 = arith.constant 0 : index
    %c0_4 = arith.constant 0 : index
    %2 = vector.load %arg2[%c0_2, %c0_3, %c0_4] : memref<1x8x32xbf16, #tpu.memory_space<vmem>>, vector<1x8x32xbf16>
    %3 = vector.shape_cast %2 : vector<1x8x32xbf16> to vector<8x32xbf16>
    %c0_5 = arith.constant 0 : index
    %c0_6 = arith.constant 0 : index
    %c0_7 = arith.constant 0 : index
    %4 = vector.load %arg3[%c0_5, %c0_6, %c0_7] : memref<1x8x32xbf16, #tpu.memory_space<vmem>>, vector<1x8x32xbf16>
    %5 = vector.shape_cast %4 : vector<1x8x32xbf16> to vector<8x32xbf16>
    %c0_8 = arith.constant 0 : index
    %c0_9 = arith.constant 0 : index
    %6 = vector.load %arg4[%c0_8, %c0_9] : memref<32x32xbf16, #tpu.memory_space<vmem>>, vector<32x32xbf16>
    %cst = arith.constant dense<0.000000e+00> : vector<8x32xf32>
    %7 = tpu.matmul %1, %6, %cst {dimension_numbers = #tpu.dot_dimension_numbers<[1], [0], [0], [1], [0, 0, 1, 1], [], []>} : vector<8x32xbf16>, vector<32x32xbf16>, vector<8x32xf32> -> vector<8x32xf32>
    %c0_10 = arith.constant 0 : index
    %c0_11 = arith.constant 0 : index
    %8 = vector.load %arg8[%c0_10, %c0_11] : memref<1x32xf32, #tpu.memory_space<vmem>>, vector<1x32xf32>
    %9 = vector.shape_cast %8 : vector<1x32xf32> to vector<32xf32>
    %10 = vector.shape_cast %9 : vector<32xf32> to vector<1x32xf32>
    %11 = vector.broadcast %10 : vector<1x32xf32> to vector<8x32xf32>
    %12 = arith.addf %7, %11 : vector<8x32xf32>
    %13 = vector.shape_cast %12 : vector<8x32xf32> to vector<1x8x32xf32>
    %14 = arith.truncf %13 : vector<1x8x32xf32> to vector<1x8x32xbf16>
    %c0_12 = arith.constant 0 : index
    %c0_13 = arith.constant 0 : index
    %15 = vector.load %arg5[%c0_12, %c0_13] : memref<32x32xbf16, #tpu.memory_space<vmem>>, vector<32x32xbf16>
    %cst_14 = arith.constant dense<0.000000e+00> : vector<8x32xf32>
    %16 = tpu.matmul %3, %15, %cst_14 {dimension_numbers = #tpu.dot_dimension_numbers<[1], [0], [0], [1], [0, 0, 1, 1], [], []>} : vector<8x32xbf16>, vector<32x32xbf16>, vector<8x32xf32> -> vector<8x32xf32>
    %c0_15 = arith.constant 0 : index
    %c0_16 = arith.constant 0 : index
    %17 = vector.load %arg9[%c0_15, %c0_16] : memref<1x32xf32, #tpu.memory_space<vmem>>, vector<1x32xf32>
    %18 = vector.shape_cast %17 : vector<1x32xf32> to vector<32xf32>
    %19 = vector.shape_cast %18 : vector<32xf32> to vector<1x32xf32>
    %20 = vector.broadcast %19 : vector<1x32xf32> to vector<8x32xf32>
    %21 = arith.addf %16, %20 : vector<8x32xf32>
    %22 = vector.shape_cast %21 : vector<8x32xf32> to vector<1x8x32xf32>
    %23 = arith.truncf %22 : vector<1x8x32xf32> to vector<1x8x32xbf16>
    %c0_17 = arith.constant 0 : index
    %c0_18 = arith.constant 0 : index
    %24 = vector.load %arg6[%c0_17, %c0_18] : memref<32x32xbf16, #tpu.memory_space<vmem>>, vector<32x32xbf16>
    %cst_19 = arith.constant dense<0.000000e+00> : vector<8x32xf32>
    %25 = tpu.matmul %5, %24, %cst_19 {dimension_numbers = #tpu.dot_dimension_numbers<[1], [0], [0], [1], [0, 0, 1, 1], [], []>} : vector<8x32xbf16>, vector<32x32xbf16>, vector<8x32xf32> -> vector<8x32xf32>
    %c0_20 = arith.constant 0 : index
    %c0_21 = arith.constant 0 : index
    %26 = vector.load %arg10[%c0_20, %c0_21] : memref<1x32xf32, #tpu.memory_space<vmem>>, vector<1x32xf32>
    %27 = vector.shape_cast %26 : vector<1x32xf32> to vector<32xf32>
    %28 = vector.shape_cast %27 : vector<32xf32> to vector<1x32xf32>
    %29 = vector.broadcast %28 : vector<1x32xf32> to vector<8x32xf32>
    %30 = arith.addf %25, %29 : vector<8x32xf32>
    %31 = vector.shape_cast %30 : vector<8x32xf32> to vector<1x8x32xf32>
    %32 = arith.truncf %31 : vector<1x8x32xf32> to vector<1x8x32xbf16>
    %33 = vector.extract_strided_slice %14 {offsets = [0, 0, 0], sizes = [1, 8, 8], strides = [1, 1, 1]} : vector<1x8x32xbf16> to vector<1x8x8xbf16>
    %34 = vector.extract_strided_slice %23 {offsets = [0, 0, 0], sizes = [1, 8, 8], strides = [1, 1, 1]} : vector<1x8x32xbf16> to vector<1x8x8xbf16>
    %35 = vector.extract_strided_slice %32 {offsets = [0, 0, 0], sizes = [1, 8, 8], strides = [1, 1, 1]} : vector<1x8x32xbf16> to vector<1x8x8xbf16>
    "tpu.trace_start"() <{level = 10 : i32, message = "bld,bsd->bls"}> : () -> ()
    %cst_22 = arith.constant dense<0.000000e+00> : vector<1x8x8xf32>
    %36 = tpu.matmul %33, %34, %cst_22 {dimension_numbers = #tpu.dot_dimension_numbers<[2], [2], [1], [1], [0, 0, 0, 1, 1, 1], [0], [0]>} : vector<1x8x8xbf16>, vector<1x8x8xbf16>, vector<1x8x8xf32> -> vector<1x8x8xf32>
    "tpu.trace_stop"() : () -> ()
    %cst_23 = arith.constant dense<0xFF800000> : vector<1x8xf32>
    %37 = vector.multi_reduction <maximumf>, %36, %cst_23 [2] : vector<1x8x8xf32> to vector<1x8xf32>
    %38 = vector.shape_cast %37 : vector<1x8xf32> to vector<1x8x1xf32>
    %39 = vector.broadcast %38 : vector<1x8x1xf32> to vector<1x8x8xf32>
    %40 = arith.subf %36, %39 : vector<1x8x8xf32>
    %41 = math.exp %40 : vector<1x8x8xf32>
    %cst_24 = arith.constant dense<0.000000e+00> : vector<1x8xf32>
    %42 = vector.multi_reduction <add>, %41, %cst_24 [2] : vector<1x8x8xf32> to vector<1x8xf32>
    %43 = vector.shape_cast %42 : vector<1x8xf32> to vector<1x8x1xf32>
    %44 = tpu.reciprocal %43 : vector<1x8x1xf32> -> vector<1x8x1xf32>
    %45 = vector.broadcast %44 : vector<1x8x1xf32> to vector<1x8x8xf32>
    %46 = arith.mulf %41, %45 : vector<1x8x8xf32>
    %cst_25 = arith.constant 2.500000e-01 : f32
    %47 = vector.broadcast %cst_25 : f32 to vector<1x8x8xf32>
    %48 = arith.mulf %46, %47 : vector<1x8x8xf32>
    %c0_26 = arith.constant 0 : index
    %c0_27 = arith.constant 0 : index
    %c0_28 = arith.constant 0 : index
    %49 = vector.load %arg13[%c0_26, %c0_27, %c0_28] : memref<1x8x8xf32, #tpu.memory_space<vmem>>, vector<1x8x8xf32>
    tpu.vector_store %arg13[%c0_26, %c0_27, %c0_28], %48 {strides = array<i32>} : memref<1x8x8xf32, #tpu.memory_space<vmem>>, vector<1x8x8xf32>,
    %50 = arith.truncf %46 : vector<1x8x8xf32> to vector<1x8x8xbf16>
    "tpu.trace_start"() <{level = 10 : i32, message = "bls,bsd->bld"}> : () -> ()
    %cst_29 = arith.constant dense<0.000000e+00> : vector<1x8x8xf32>
    %51 = tpu.matmul %50, %35, %cst_29 {dimension_numbers = #tpu.dot_dimension_numbers<[2], [1], [1], [2], [0, 0, 0, 1, 1, 2], [0], [0]>} : vector<1x8x8xbf16>, vector<1x8x8xbf16>, vector<1x8x8xf32> -> vector<1x8x8xf32>
    "tpu.trace_stop"() : () -> ()
    %52 = arith.truncf %51 : vector<1x8x8xf32> to vector<1x8x8xbf16>
    %c0_30 = arith.constant 0 : index
    %c0_31 = arith.constant 0 : index
    %c0_32 = arith.constant 0 : index
    %53 = vector.load %arg14[%c0_30, %c0_31, %c0_32] : memref<1x8x32xbf16, #tpu.memory_space<vmem>>, vector<1x8x8xbf16>
    tpu.vector_store %arg14[%c0_30, %c0_31, %c0_32], %52 {strides = array<i32>} : memref<1x8x32xbf16, #tpu.memory_space<vmem>>, vector<1x8x8xbf16>,
    %54 = vector.extract_strided_slice %14 {offsets = [0, 0, 8], sizes = [1, 8, 8], strides = [1, 1, 1]} : vector<1x8x32xbf16> to vector<1x8x8xbf16>
    %55 = vector.extract_strided_slice %23 {offsets = [0, 0, 8], sizes = [1, 8, 8], strides = [1, 1, 1]} : vector<1x8x32xbf16> to vector<1x8x8xbf16>
    %56 = vector.extract_strided_slice %32 {offsets = [0, 0, 8], sizes = [1, 8, 8], strides = [1, 1, 1]} : vector<1x8x32xbf16> to vector<1x8x8xbf16>
    "tpu.trace_start"() <{level = 10 : i32, message = "bld,bsd->bls"}> : () -> ()
    %cst_33 = arith.constant dense<0.000000e+00> : vector<1x8x8xf32>
    %57 = tpu.matmul %54, %55, %cst_33 {dimension_numbers = #tpu.dot_dimension_numbers<[2], [2], [1], [1], [0, 0, 0, 1, 1, 1], [0], [0]>} : vector<1x8x8xbf16>, vector<1x8x8xbf16>, vector<1x8x8xf32> -> vector<1x8x8xf32>
    "tpu.trace_stop"() : () -> ()
    %cst_34 = arith.constant dense<0xFF800000> : vector<1x8xf32>
    %58 = vector.multi_reduction <maximumf>, %57, %cst_34 [2] : vector<1x8x8xf32> to vector<1x8xf32>
    %59 = vector.shape_cast %58 : vector<1x8xf32> to vector<1x8x1xf32>
    %60 = vector.broadcast %59 : vector<1x8x1xf32> to vector<1x8x8xf32>
    %61 = arith.subf %57, %60 : vector<1x8x8xf32>
    %62 = math.exp %61 : vector<1x8x8xf32>
    %cst_35 = arith.constant dense<0.000000e+00> : vector<1x8xf32>
    %63 = vector.multi_reduction <add>, %62, %cst_35 [2] : vector<1x8x8xf32> to vector<1x8xf32>
    %64 = vector.shape_cast %63 : vector<1x8xf32> to vector<1x8x1xf32>
    %65 = tpu.reciprocal %64 : vector<1x8x1xf32> -> vector<1x8x1xf32>
    %66 = vector.broadcast %65 : vector<1x8x1xf32> to vector<1x8x8xf32>
    %67 = arith.mulf %62, %66 : vector<1x8x8xf32>
    %c0_36 = arith.constant 0 : index
    %c0_37 = arith.constant 0 : index
    %c0_38 = arith.constant 0 : index
    %68 = vector.load %arg13[%c0_36, %c0_37, %c0_38] : memref<1x8x8xf32, #tpu.memory_space<vmem>>, vector<1x8x8xf32>
    %cst_39 = arith.constant 2.500000e-01 : f32
    %69 = vector.broadcast %cst_39 : f32 to vector<1x8x8xf32>
    %70 = arith.mulf %67, %69 : vector<1x8x8xf32>
    %71 = arith.addf %68, %70 : vector<1x8x8xf32>
    %c0_40 = arith.constant 0 : index
    %c0_41 = arith.constant 0 : index
    %c0_42 = arith.constant 0 : index
    %72 = vector.load %arg13[%c0_40, %c0_41, %c0_42] : memref<1x8x8xf32, #tpu.memory_space<vmem>>, vector<1x8x8xf32>
    tpu.vector_store %arg13[%c0_40, %c0_41, %c0_42], %71 {strides = array<i32>} : memref<1x8x8xf32, #tpu.memory_space<vmem>>, vector<1x8x8xf32>,
    %73 = arith.truncf %67 : vector<1x8x8xf32> to vector<1x8x8xbf16>
    "tpu.trace_start"() <{level = 10 : i32, message = "bls,bsd->bld"}> : () -> ()
    %cst_43 = arith.constant dense<0.000000e+00> : vector<1x8x8xf32>
    %74 = tpu.matmul %73, %56, %cst_43 {dimension_numbers = #tpu.dot_dimension_numbers<[2], [1], [1], [2], [0, 0, 0, 1, 1, 2], [0], [0]>} : vector<1x8x8xbf16>, vector<1x8x8xbf16>, vector<1x8x8xf32> -> vector<1x8x8xf32>
    "tpu.trace_stop"() : () -> ()
    %75 = arith.truncf %74 : vector<1x8x8xf32> to vector<1x8x8xbf16>
    %c0_44 = arith.constant 0 : index
    %c0_45 = arith.constant 0 : index
    %c8 = arith.constant 8 : index
    %76 = vector.load %arg14[%c0_44, %c0_45, %c8] : memref<1x8x32xbf16, #tpu.memory_space<vmem>>, vector<1x8x8xbf16>
    tpu.vector_store %arg14[%c0_44, %c0_45, %c8], %75 {strides = array<i32>} : memref<1x8x32xbf16, #tpu.memory_space<vmem>>, vector<1x8x8xbf16>,
    %77 = vector.extract_strided_slice %14 {offsets = [0, 0, 16], sizes = [1, 8, 8], strides = [1, 1, 1]} : vector<1x8x32xbf16> to vector<1x8x8xbf16>
    %78 = vector.extract_strided_slice %23 {offsets = [0, 0, 16], sizes = [1, 8, 8], strides = [1, 1, 1]} : vector<1x8x32xbf16> to vector<1x8x8xbf16>
    %79 = vector.extract_strided_slice %32 {offsets = [0, 0, 16], sizes = [1, 8, 8], strides = [1, 1, 1]} : vector<1x8x32xbf16> to vector<1x8x8xbf16>
    "tpu.trace_start"() <{level = 10 : i32, message = "bld,bsd->bls"}> : () -> ()
    %cst_46 = arith.constant dense<0.000000e+00> : vector<1x8x8xf32>
    %80 = tpu.matmul %77, %78, %cst_46 {dimension_numbers = #tpu.dot_dimension_numbers<[2], [2], [1], [1], [0, 0, 0, 1, 1, 1], [0], [0]>} : vector<1x8x8xbf16>, vector<1x8x8xbf16>, vector<1x8x8xf32> -> vector<1x8x8xf32>
    "tpu.trace_stop"() : () -> ()
    %cst_47 = arith.constant dense<0xFF800000> : vector<1x8xf32>
    %81 = vector.multi_reduction <maximumf>, %80, %cst_47 [2] : vector<1x8x8xf32> to vector<1x8xf32>
    %82 = vector.shape_cast %81 : vector<1x8xf32> to vector<1x8x1xf32>
    %83 = vector.broadcast %82 : vector<1x8x1xf32> to vector<1x8x8xf32>
    %84 = arith.subf %80, %83 : vector<1x8x8xf32>
    %85 = math.exp %84 : vector<1x8x8xf32>
    %cst_48 = arith.constant dense<0.000000e+00> : vector<1x8xf32>
    %86 = vector.multi_reduction <add>, %85, %cst_48 [2] : vector<1x8x8xf32> to vector<1x8xf32>
    %87 = vector.shape_cast %86 : vector<1x8xf32> to vector<1x8x1xf32>
    %88 = tpu.reciprocal %87 : vector<1x8x1xf32> -> vector<1x8x1xf32>
    %89 = vector.broadcast %88 : vector<1x8x1xf32> to vector<1x8x8xf32>
    %90 = arith.mulf %85, %89 : vector<1x8x8xf32>
    %c0_49 = arith.constant 0 : index
    %c0_50 = arith.constant 0 : index
    %c0_51 = arith.constant 0 : index
    %91 = vector.load %arg13[%c0_49, %c0_50, %c0_51] : memref<1x8x8xf32, #tpu.memory_space<vmem>>, vector<1x8x8xf32>
    %cst_52 = arith.constant 2.500000e-01 : f32
    %92 = vector.broadcast %cst_52 : f32 to vector<1x8x8xf32>
    %93 = arith.mulf %90, %92 : vector<1x8x8xf32>
    %94 = arith.addf %91, %93 : vector<1x8x8xf32>
    %c0_53 = arith.constant 0 : index
    %c0_54 = arith.constant 0 : index
    %c0_55 = arith.constant 0 : index
    %95 = vector.load %arg13[%c0_53, %c0_54, %c0_55] : memref<1x8x8xf32, #tpu.memory_space<vmem>>, vector<1x8x8xf32>
    tpu.vector_store %arg13[%c0_53, %c0_54, %c0_55], %94 {strides = array<i32>} : memref<1x8x8xf32, #tpu.memory_space<vmem>>, vector<1x8x8xf32>,
    %96 = arith.truncf %90 : vector<1x8x8xf32> to vector<1x8x8xbf16>
    "tpu.trace_start"() <{level = 10 : i32, message = "bls,bsd->bld"}> : () -> ()
    %cst_56 = arith.constant dense<0.000000e+00> : vector<1x8x8xf32>
    %97 = tpu.matmul %96, %79, %cst_56 {dimension_numbers = #tpu.dot_dimension_numbers<[2], [1], [1], [2], [0, 0, 0, 1, 1, 2], [0], [0]>} : vector<1x8x8xbf16>, vector<1x8x8xbf16>, vector<1x8x8xf32> -> vector<1x8x8xf32>
    "tpu.trace_stop"() : () -> ()
    %98 = arith.truncf %97 : vector<1x8x8xf32> to vector<1x8x8xbf16>
    %c0_57 = arith.constant 0 : index
    %c0_58 = arith.constant 0 : index
    %c16 = arith.constant 16 : index
    %99 = vector.load %arg14[%c0_57, %c0_58, %c16] : memref<1x8x32xbf16, #tpu.memory_space<vmem>>, vector<1x8x8xbf16>
    tpu.vector_store %arg14[%c0_57, %c0_58, %c16], %98 {strides = array<i32>} : memref<1x8x32xbf16, #tpu.memory_space<vmem>>, vector<1x8x8xbf16>,
    %100 = vector.extract_strided_slice %14 {offsets = [0, 0, 24], sizes = [1, 8, 8], strides = [1, 1, 1]} : vector<1x8x32xbf16> to vector<1x8x8xbf16>
    %101 = vector.extract_strided_slice %23 {offsets = [0, 0, 24], sizes = [1, 8, 8], strides = [1, 1, 1]} : vector<1x8x32xbf16> to vector<1x8x8xbf16>
    %102 = vector.extract_strided_slice %32 {offsets = [0, 0, 24], sizes = [1, 8, 8], strides = [1, 1, 1]} : vector<1x8x32xbf16> to vector<1x8x8xbf16>
    "tpu.trace_start"() <{level = 10 : i32, message = "bld,bsd->bls"}> : () -> ()
    %cst_59 = arith.constant dense<0.000000e+00> : vector<1x8x8xf32>
    %103 = tpu.matmul %100, %101, %cst_59 {dimension_numbers = #tpu.dot_dimension_numbers<[2], [2], [1], [1], [0, 0, 0, 1, 1, 1], [0], [0]>} : vector<1x8x8xbf16>, vector<1x8x8xbf16>, vector<1x8x8xf32> -> vector<1x8x8xf32>
    "tpu.trace_stop"() : () -> ()
    %cst_60 = arith.constant dense<0xFF800000> : vector<1x8xf32>
    %104 = vector.multi_reduction <maximumf>, %103, %cst_60 [2] : vector<1x8x8xf32> to vector<1x8xf32>
    %105 = vector.shape_cast %104 : vector<1x8xf32> to vector<1x8x1xf32>
    %106 = vector.broadcast %105 : vector<1x8x1xf32> to vector<1x8x8xf32>
    %107 = arith.subf %103, %106 : vector<1x8x8xf32>
    %108 = math.exp %107 : vector<1x8x8xf32>
    %cst_61 = arith.constant dense<0.000000e+00> : vector<1x8xf32>
    %109 = vector.multi_reduction <add>, %108, %cst_61 [2] : vector<1x8x8xf32> to vector<1x8xf32>
    %110 = vector.shape_cast %109 : vector<1x8xf32> to vector<1x8x1xf32>
    %111 = tpu.reciprocal %110 : vector<1x8x1xf32> -> vector<1x8x1xf32>
    %112 = vector.broadcast %111 : vector<1x8x1xf32> to vector<1x8x8xf32>
    %113 = arith.mulf %108, %112 : vector<1x8x8xf32>
    %c0_62 = arith.constant 0 : index
    %c0_63 = arith.constant 0 : index
    %c0_64 = arith.constant 0 : index
    %114 = vector.load %arg13[%c0_62, %c0_63, %c0_64] : memref<1x8x8xf32, #tpu.memory_space<vmem>>, vector<1x8x8xf32>
    %cst_65 = arith.constant 2.500000e-01 : f32
    %115 = vector.broadcast %cst_65 : f32 to vector<1x8x8xf32>
    %116 = arith.mulf %113, %115 : vector<1x8x8xf32>
    %117 = arith.addf %114, %116 : vector<1x8x8xf32>
    %c0_66 = arith.constant 0 : index
    %c0_67 = arith.constant 0 : index
    %c0_68 = arith.constant 0 : index
    %118 = vector.load %arg13[%c0_66, %c0_67, %c0_68] : memref<1x8x8xf32, #tpu.memory_space<vmem>>, vector<1x8x8xf32>
    tpu.vector_store %arg13[%c0_66, %c0_67, %c0_68], %117 {strides = array<i32>} : memref<1x8x8xf32, #tpu.memory_space<vmem>>, vector<1x8x8xf32>,
    %119 = arith.truncf %113 : vector<1x8x8xf32> to vector<1x8x8xbf16>
    "tpu.trace_start"() <{level = 10 : i32, message = "bls,bsd->bld"}> : () -> ()
    %cst_69 = arith.constant dense<0.000000e+00> : vector<1x8x8xf32>
    %120 = tpu.matmul %119, %102, %cst_69 {dimension_numbers = #tpu.dot_dimension_numbers<[2], [1], [1], [2], [0, 0, 0, 1, 1, 2], [0], [0]>} : vector<1x8x8xbf16>, vector<1x8x8xbf16>, vector<1x8x8xf32> -> vector<1x8x8xf32>
    "tpu.trace_stop"() : () -> ()
    %121 = arith.truncf %120 : vector<1x8x8xf32> to vector<1x8x8xbf16>
    %c0_70 = arith.constant 0 : index
    %c0_71 = arith.constant 0 : index
    %c24 = arith.constant 24 : index
    %122 = vector.load %arg14[%c0_70, %c0_71, %c24] : memref<1x8x32xbf16, #tpu.memory_space<vmem>>, vector<1x8x8xbf16>
    tpu.vector_store %arg14[%c0_70, %c0_71, %c24], %121 {strides = array<i32>} : memref<1x8x32xbf16, #tpu.memory_space<vmem>>, vector<1x8x8xbf16>,
    %c0_72 = arith.constant 0 : index
    %c0_73 = arith.constant 0 : index
    %c0_74 = arith.constant 0 : index
    %123 = vector.load %arg14[%c0_72, %c0_73, %c0_74] : memref<1x8x32xbf16, #tpu.memory_space<vmem>>, vector<1x8x32xbf16>
    %124 = vector.shape_cast %123 : vector<1x8x32xbf16> to vector<8x32xbf16>
    %c0_75 = arith.constant 0 : index
    %c0_76 = arith.constant 0 : index
    %125 = vector.load %arg7[%c0_75, %c0_76] : memref<32x32xbf16, #tpu.memory_space<vmem>>, vector<32x32xbf16>
    %cst_77 = arith.constant dense<0.000000e+00> : vector<8x32xf32>
    %126 = tpu.matmul %124, %125, %cst_77 {dimension_numbers = #tpu.dot_dimension_numbers<[1], [0], [0], [1], [0, 0, 1, 1], [], []>} : vector<8x32xbf16>, vector<32x32xbf16>, vector<8x32xf32> -> vector<8x32xf32>
    %c0_78 = arith.constant 0 : index
    %c0_79 = arith.constant 0 : index
    %127 = vector.load %arg11[%c0_78, %c0_79] : memref<1x32xf32, #tpu.memory_space<vmem>>, vector<1x32xf32>
    %128 = vector.shape_cast %127 : vector<1x32xf32> to vector<32xf32>
    %129 = vector.shape_cast %128 : vector<32xf32> to vector<1x32xf32>
    %130 = vector.broadcast %129 : vector<1x32xf32> to vector<8x32xf32>
    %131 = arith.addf %126, %130 : vector<8x32xf32>
    %132 = vector.shape_cast %131 : vector<8x32xf32> to vector<1x8x32xf32>
    %c0_80 = arith.constant 0 : index
    %c0_81 = arith.constant 0 : index
    %c0_82 = arith.constant 0 : index
    %133 = vector.load %arg12[%c0_80, %c0_81, %c0_82] : memref<1x8x32xf32, #tpu.memory_space<vmem>>, vector<1x8x32xf32>
    tpu.vector_store %arg12[%c0_80, %c0_81, %c0_82], %132 {strides = array<i32>} : memref<1x8x32xf32, #tpu.memory_space<vmem>>, vector<1x8x32xf32>,
    return
  }
  func.func @transform_0(%arg0: i32) -> (i32, i32, i32) {
    %c0_i32 = arith.constant 0 : i32
    %c0_i32_0 = arith.constant 0 : i32
    %c0_i32_1 = arith.constant 0 : i32
    return %arg0, %c0_i32, %c0_i32_0 : i32, i32, i32
  }
  func.func @transform_1(%arg0: i32) -> (i32, i32, i32) {
    %c0_i32 = arith.constant 0 : i32
    %c0_i32_0 = arith.constant 0 : i32
    %c0_i32_1 = arith.constant 0 : i32
    return %arg0, %c0_i32, %c0_i32_0 : i32, i32, i32
  }
  func.func @transform_2(%arg0: i32) -> (i32, i32, i32) {
    %c0_i32 = arith.constant 0 : i32
    %c0_i32_0 = arith.constant 0 : i32
    %c0_i32_1 = arith.constant 0 : i32
    return %arg0, %c0_i32, %c0_i32_0 : i32, i32, i32
  }
  func.func @transform_3(%arg0: i32) -> (i32, i32) {
    %c0_i32 = arith.constant 0 : i32
    %c0_i32_0 = arith.constant 0 : i32
    %c0_i32_1 = arith.constant 0 : i32
    return %c0_i32, %c0_i32_0 : i32, i32
  }
  func.func @transform_4(%arg0: i32) -> (i32, i32) {
    %c0_i32 = arith.constant 0 : i32
    %c0_i32_0 = arith.constant 0 : i32
    %c0_i32_1 = arith.constant 0 : i32
    return %c0_i32, %c0_i32_0 : i32, i32
  }
  func.func @transform_5(%arg0: i32) -> (i32, i32) {
    %c0_i32 = arith.constant 0 : i32
    %c0_i32_0 = arith.constant 0 : i32
    %c0_i32_1 = arith.constant 0 : i32
    return %c0_i32, %c0_i32_0 : i32, i32
  }
  func.func @transform_6(%arg0: i32) -> (i32, i32) {
    %c0_i32 = arith.constant 0 : i32
    %c0_i32_0 = arith.constant 0 : i32
    %c0_i32_1 = arith.constant 0 : i32
    return %c0_i32, %c0_i32_0 : i32, i32
  }
  func.func @transform_7(%arg0: i32) -> (i32, i32) {
    %c0_i32 = arith.constant 0 : i32
    %c0_i32_0 = arith.constant 0 : i32
    %c0_i32_1 = arith.constant 0 : i32
    return %c0_i32, %c0_i32_0 : i32, i32
  }
  func.func @transform_8(%arg0: i32) -> (i32, i32) {
    %c0_i32 = arith.constant 0 : i32
    %c0_i32_0 = arith.constant 0 : i32
    %c0_i32_1 = arith.constant 0 : i32
    return %c0_i32, %c0_i32_0 : i32, i32
  }
  func.func @transform_9(%arg0: i32) -> (i32, i32) {
    %c0_i32 = arith.constant 0 : i32
    %c0_i32_0 = arith.constant 0 : i32
    %c0_i32_1 = arith.constant 0 : i32
    return %c0_i32, %c0_i32_0 : i32, i32
  }
  func.func @transform_10(%arg0: i32) -> (i32, i32) {
    %c0_i32 = arith.constant 0 : i32
    %c0_i32_0 = arith.constant 0 : i32
    %c0_i32_1 = arith.constant 0 : i32
    return %c0_i32, %c0_i32_0 : i32, i32
  }
  func.func @transform_11(%arg0: i32) -> (i32, i32, i32) {
    %c0_i32 = arith.constant 0 : i32
    %c0_i32_0 = arith.constant 0 : i32
    %c0_i32_1 = arith.constant 0 : i32
    return %arg0, %c0_i32, %c0_i32_0 : i32, i32, i32
  }
  func.func @transform_12(%arg0: i32) -> (i32, i32, i32) {
    %c0_i32 = arith.constant 0 : i32
    %c0_i32_0 = arith.constant 0 : i32
    %c0_i32_1 = arith.constant 0 : i32
    return %arg0, %c0_i32, %c0_i32_0 : i32, i32, i32
  }
}

</mosaic_0001>

<llo_original>
// kernel: tpu_custom_call.1
$region0: #{tpu_custom_call.1}
  #allocation0 [shape = 'u32[]', space=smem, size = 0x4, offset = 0x4, fixed_abs, tag = 'smem constant byte address 0x4 - core index']
  #allocation1 [shape = 'u32[144,128]{1,0:T(1,128)}', space=vmem, size = 0x12000, scoped, tag = 'internal scratch']
  #allocation2 [shape = 'bf16[1,8,32]{2,1,0:T(8,128)(2,1)}', space=vmem, size = 0x800, scoped, tag = 'scratch operand']
  %s0 = inlined_call_operand.hbm [shape: bf16[2,8,32], index: 0, kind: input, shape index: {}]
  %s1 = inlined_call_operand.hbm [shape: bf16[2,8,32], index: 1, kind: input, shape index: {}]
  %s2 = inlined_call_operand.hbm [shape: bf16[2,8,32], index: 2, kind: input, shape index: {}]
  %s3 = inlined_call_operand.hbm [shape: bf16[32,32], index: 3, kind: input, shape index: {}]
  %s4 = inlined_call_operand.hbm [shape: bf16[32,32], index: 4, kind: input, shape index: {}]
  %s5 = inlined_call_operand.hbm [shape: bf16[32,32], index: 5, kind: input, shape index: {}]
  %s6 = inlined_call_operand.hbm [shape: bf16[32,32], index: 6, kind: input, shape index: {}]
  %s7 = inlined_call_operand.vmem [shape: f32[1,32], index: 7, kind: input, shape index: {}]
  %s8 = inlined_call_operand.vmem [shape: f32[1,32], index: 8, kind: input, shape index: {}]
  %s9 = inlined_call_operand.vmem [shape: f32[1,32], index: 9, kind: input, shape index: {}]
  %s10 = inlined_call_operand.vmem [shape: f32[1,32], index: 10, kind: input, shape index: {}]
  %s11 = inlined_call_operand.hbm [shape: f32[2,8,32], index: 11, kind: output, shape index: {0}]
  %s12 = inlined_call_operand.hbm [shape: f32[2,8,8], index: 12, kind: output, shape index: {1}]
  %13 = xla_tuple %s11, %s12
  %s14 = sld [smem:[#allocation0]]
  $region113: #{tpu_custom_call.1} parent=0
    _
  %s16 = ssub.s32 1, %s14
  %s17 = scalar_select 0, %s16, %s14
  $region1: #{tpu_custom_call.1} parent=0
    #allocation3 [shape = 'u8[4096]{0}', space=vmem, size = 0x1000, scoped, tag = 'input window, operand 0']
    #allocation4 [shape = 's32[2]{0}', space=sflag, size = 0x8, scoped, tag = 'scoped memory for tpu_custom_call.1']
    #allocation5 [shape = 's32[2]{0}', space=sflag, size = 0x8, scoped, tag = 'scoped memory for tpu_custom_call.1']
    #allocation6 [shape = 'u8[4096]{0}', space=vmem, size = 0x1000, scoped, tag = 'input window, operand 1']
    #allocation7 [shape = 's32[2]{0}', space=sflag, size = 0x8, scoped, tag = 'scoped memory for tpu_custom_call.1']
    #allocation8 [shape = 'u8[4096]{0}', space=vmem, size = 0x1000, scoped, tag = 'input window, operand 2']
    #allocation9 [shape = 'u8[8192]{0}', space=vmem, size = 0x2000, scoped, tag = 'input window, operand 3, single buffered']
    #allocation10 [shape = 's32[1]{0}', space=sflag, size = 0x4, scoped, tag = 'scoped memory for tpu_custom_call.1']
    #allocation11 [shape = 'u8[8192]{0}', space=vmem, size = 0x2000, scoped, tag = 'input window, operand 4, single buffered']
    #allocation12 [shape = 'u8[8192]{0}', space=vmem, size = 0x2000, scoped, tag = 'input window, operand 5, single buffered']
    #allocation13 [shape = 's32[1]{0}', space=sflag, size = 0x4, scoped, tag = 'scoped memory for tpu_custom_call.1']
    #allocation14 [shape = 'u8[8192]{0}', space=vmem, size = 0x2000, scoped, tag = 'input window, operand 6, single buffered']
    #allocation15 [shape = 'u8[8192]{0}', space=vmem, size = 0x2000, scoped, tag = 'output window, operand 0']
    #allocation16 [shape = 'u8[8192]{0}', space=vmem, size = 0x2000, scoped, tag = 'output window, operand 1']
    #allocation17 [shape = 's32[2]{0}', space=sflag, size = 0x8, scoped, tag = 'scoped memory for tpu_custom_call.1']
    %18 = vsyncpa [#allocation4], 0
    %s19 = scalar_lea.sflag [#allocation4], 1
    %20 = vsyncpa %s19, 0
    %21 = vsyncpa [#allocation7], 0
    %s22 = scalar_lea.sflag [#allocation7], 1
    %23 = vsyncpa %s22, 0
    %24 = vsyncpa [#allocation10], 0
    %25 = vsyncpa [#allocation13], 0
    %26 = vsyncpa [#allocation5], 0
    %s27 = scalar_lea.sflag [#allocation5], 1
    %28 = vsyncpa %s27, 0
    %29 = vsyncpa [#allocation17], 0
    %s30 = scalar_lea.sflag [#allocation17], 1
    %31 = vsyncpa %s30, 0
    loop: start=0, step=1, limit=4
    $region2: #{tpu_custom_call.1} parent=1 // loop_pre_header
      _
    $region3: #{tpu_custom_call.1} parent=1 // loop_header
      %s33 = sphi 0, %s37
      %p34 = scmp.ge.s32.totalorder %s33, 4
      %s43 = sphi 0, %s45
      %s46 = sphi 0, %s43
      %s47 = sphi 0, %s46
      %s63 = sphi 0, %s47
      %s69 = sphi 0, %s71
      %s72 = sphi 0, %s69
      %s73 = sphi 0, %s72
      %s89 = sphi 0, %s73
      %s95 = sphi 0, %s97
      %s98 = sphi 0, %s95
      %s99 = sphi 0, %s98
      %s115 = sphi 0, %s99
      %s119 = sphi 0, %s119
      %s121 = sphi 0, %s119
      %s122 = sphi 0, %s121
      %s136 = sphi 0, %s122
      %s140 = sphi 0, %s140
      %s142 = sphi 0, %s140
      %s143 = sphi 0, %s142
      %s157 = sphi 0, %s143
      %s161 = sphi 0, %s161
      %s163 = sphi 0, %s161
      %s164 = sphi 0, %s163
      %s178 = sphi 0, %s164
      %s182 = sphi 0, %s182
      %s184 = sphi 0, %s182
      %s185 = sphi 0, %s184
      %s199 = sphi 0, %s185
      %s203 = sphi 0, %s203
      %s205 = sphi 0, %s203
      %s206 = sphi 0, %s205
      %s220 = sphi 0, %s206
      %s224 = sphi 0, %s224
      %s226 = sphi 0, %s224
      %s227 = sphi 0, %s226
      %s241 = sphi 0, %s227
      %s245 = sphi 0, %s245
      %s247 = sphi 0, %s245
      %s248 = sphi 0, %s247
      %s262 = sphi 0, %s248
      %s266 = sphi 0, %s266
      %s268 = sphi 0, %s266
      %s269 = sphi 0, %s268
      %s283 = sphi 0, %s269
      %s289 = sphi 0, %s291
      %s292 = sphi 0, %s289
      %s293 = sphi 0, %s292
      %s309 = sphi 0, %s293
      %s315 = sphi 0, %s317
      %s318 = sphi 0, %s315
      %s319 = sphi 0, %s318
      %s335 = sphi 0, %s319
    $region4: #{tpu_custom_call.1} parent=1 // loop_header_branch
      %36 = sbr.rel (%p34) target = $region8
    $region5: #{tpu_custom_call.1} parent=1 // loop_body
      %s38 = ssub.s32 %s33, 1
      %s39 = ssub.s32 %s33, 2
      %s40 = sadd.s32 %s33, 1
      %s41 = ssub.s32 %s33, %s40
      %p42 = scmp.eq.s32.totalorder %s41, 0
      %s44 = sadd.s32 %s43, 1
      %s45 = scalar_select %p42, %s43, %s44
      %p48 = pneg %p42
      %p49 = scmp.eq.s32.totalorder %s33, 1
      %p50 = por %p48, %p49
      %p51 = scmp.ne.s32.totalorder %s43, %s46
      %p52 = scmp.eq.s32.totalorder %s33, 0
      %p53 = por %p51, %p52
      %p54 = scmp.ne.s32.totalorder %s43, %s46
      %p55 = scmp.eq.s32.totalorder %s38, 1
      %p56 = por %p54, %p55
      %p57 = scmp.ne.s32.totalorder %s46, %s47
      %p58 = scmp.eq.s32.totalorder %s38, 0
      %p59 = por %p57, %p58
      %p60 = scmp.ne.s32.totalorder %s46, %s47
      %p61 = scmp.eq.s32.totalorder %s39, 1
      %p62 = por %p60, %p61
      %p64 = scmp.ne.s32.totalorder %s47, %s63
      %p65 = scmp.eq.s32.totalorder %s39, 0
      %p66 = por %p64, %p65
      %s67 = ssub.s32 %s33, %s40
      %p68 = scmp.eq.s32.totalorder %s67, 0
      %s70 = sadd.s32 %s69, 1
      %s71 = scalar_select %p68, %s69, %s70
      %p74 = pneg %p68
      %p75 = scmp.eq.s32.totalorder %s33, 1
      %p76 = por %p74, %p75
      %p77 = scmp.ne.s32.totalorder %s69, %s72
      %p78 = scmp.eq.s32.totalorder %s33, 0
      %p79 = por %p77, %p78
      %p80 = scmp.ne.s32.totalorder %s69, %s72
      %p81 = scmp.eq.s32.totalorder %s38, 1
      %p82 = por %p80, %p81
      %p83 = scmp.ne.s32.totalorder %s72, %s73
      %p84 = scmp.eq.s32.totalorder %s38, 0
      %p85 = por %p83, %p84
      %p86 = scmp.ne.s32.totalorder %s72, %s73
      %p87 = scmp.eq.s32.totalorder %s39, 1
      %p88 = por %p86, %p87
      %p90 = scmp.ne.s32.totalorder %s73, %s89
      %p91 = scmp.eq.s32.totalorder %s39, 0
      %p92 = por %p90, %p91
      %s93 = ssub.s32 %s33, %s40
      %p94 = scmp.eq.s32.totalorder %s93, 0
      %s96 = sadd.s32 %s95, 1
      %s97 = scalar_select %p94, %s95, %s96
      %p100 = pneg %p94
      %p101 = scmp.eq.s32.totalorder %s33, 1
      %p102 = por %p100, %p101
      %p103 = scmp.ne.s32.totalorder %s95, %s98
      %p104 = scmp.eq.s32.totalorder %s33, 0
      %p105 = por %p103, %p104
      %p106 = scmp.ne.s32.totalorder %s95, %s98
      %p107 = scmp.eq.s32.totalorder %s38, 1
      %p108 = por %p106, %p107
      %p109 = scmp.ne.s32.totalorder %s98, %s99
      %p110 = scmp.eq.s32.totalorder %s38, 0
      %p111 = por %p109, %p110
      %p112 = scmp.ne.s32.totalorder %s98, %s99
      %p113 = scmp.eq.s32.totalorder %s39, 1
      %p114 = por %p112, %p113
      %p116 = scmp.ne.s32.totalorder %s99, %s115
      %p117 = scmp.eq.s32.totalorder %s39, 0
      %p118 = por %p116, %p117
      %s120 = sadd.s32 %s119, 1
      %p123 = scmp.eq.s32.totalorder %s33, 1
      %p124 = scmp.ne.s32.totalorder %s119, %s121
      %p125 = scmp.eq.s32.totalorder %s33, 0
      %p126 = por %p124, %p125
      %p127 = scmp.ne.s32.totalorder %s119, %s121
      %p128 = scmp.eq.s32.totalorder %s38, 1
      %p129 = por %p127, %p128
      %p130 = scmp.ne.s32.totalorder %s121, %s122
      %p131 = scmp.eq.s32.totalorder %s38, 0
      %p132 = por %p130, %p131
      %p133 = scmp.ne.s32.totalorder %s121, %s122
      %p134 = scmp.eq.s32.totalorder %s39, 1
      %p135 = por %p133, %p134
      %p137 = scmp.ne.s32.totalorder %s122, %s136
      %p138 = scmp.eq.s32.totalorder %s39, 0
      %p139 = por %p137, %p138
      %s141 = sadd.s32 %s140, 1
      %p144 = scmp.eq.s32.totalorder %s33, 1
      %p145 = scmp.ne.s32.totalorder %s140, %s142
      %p146 = scmp.eq.s32.totalorder %s33, 0
      %p147 = por %p145, %p146
      %p148 = scmp.ne.s32.totalorder %s140, %s142
      %p149 = scmp.eq.s32.totalorder %s38, 1
      %p150 = por %p148, %p149
      %p151 = scmp.ne.s32.totalorder %s142, %s143
      %p152 = scmp.eq.s32.totalorder %s38, 0
      %p153 = por %p151, %p152
      %p154 = scmp.ne.s32.totalorder %s142, %s143
      %p155 = scmp.eq.s32.totalorder %s39, 1
      %p156 = por %p154, %p155
      %p158 = scmp.ne.s32.totalorder %s143, %s157
      %p159 = scmp.eq.s32.totalorder %s39, 0
      %p160 = por %p158, %p159
      %s162 = sadd.s32 %s161, 1
      %p165 = scmp.eq.s32.totalorder %s33, 1
      %p166 = scmp.ne.s32.totalorder %s161, %s163
      %p167 = scmp.eq.s32.totalorder %s33, 0
      %p168 = por %p166, %p167
      %p169 = scmp.ne.s32.totalorder %s161, %s163
      %p170 = scmp.eq.s32.totalorder %s38, 1
      %p171 = por %p169, %p170
      %p172 = scmp.ne.s32.totalorder %s163, %s164
      %p173 = scmp.eq.s32.totalorder %s38, 0
      %p174 = por %p172, %p173
      %p175 = scmp.ne.s32.totalorder %s163, %s164
      %p176 = scmp.eq.s32.totalorder %s39, 1
      %p177 = por %p175, %p176
      %p179 = scmp.ne.s32.totalorder %s164, %s178
      %p180 = scmp.eq.s32.totalorder %s39, 0
      %p181 = por %p179, %p180
      %s183 = sadd.s32 %s182, 1
      %p186 = scmp.eq.s32.totalorder %s33, 1
      %p187 = scmp.ne.s32.totalorder %s182, %s184
      %p188 = scmp.eq.s32.totalorder %s33, 0
      %p189 = por %p187, %p188
      %p190 = scmp.ne.s32.totalorder %s182, %s184
      %p191 = scmp.eq.s32.totalorder %s38, 1
      %p192 = por %p190, %p191
      %p193 = scmp.ne.s32.totalorder %s184, %s185
      %p194 = scmp.eq.s32.totalorder %s38, 0
      %p195 = por %p193, %p194
      %p196 = scmp.ne.s32.totalorder %s184, %s185
      %p197 = scmp.eq.s32.totalorder %s39, 1
      %p198 = por %p196, %p197
      %p200 = scmp.ne.s32.totalorder %s185, %s199
      %p201 = scmp.eq.s32.totalorder %s39, 0
      %p202 = por %p200, %p201
      %s204 = sadd.s32 %s203, 1
      %p207 = scmp.eq.s32.totalorder %s33, 1
      %p208 = scmp.ne.s32.totalorder %s203, %s205
      %p209 = scmp.eq.s32.totalorder %s33, 0
      %p210 = por %p208, %p209
      %p211 = scmp.ne.s32.totalorder %s203, %s205
      %p212 = scmp.eq.s32.totalorder %s38, 1
      %p213 = por %p211, %p212
      %p214 = scmp.ne.s32.totalorder %s205, %s206
      %p215 = scmp.eq.s32.totalorder %s38, 0
      %p216 = por %p214, %p215
      %p217 = scmp.ne.s32.totalorder %s205, %s206
      %p218 = scmp.eq.s32.totalorder %s39, 1
      %p219 = por %p217, %p218
      %p221 = scmp.ne.s32.totalorder %s206, %s220
      %p222 = scmp.eq.s32.totalorder %s39, 0
      %p223 = por %p221, %p222
      %s225 = sadd.s32 %s224, 1
      %p228 = scmp.eq.s32.totalorder %s33, 1
      %p229 = scmp.ne.s32.totalorder %s224, %s226
      %p230 = scmp.eq.s32.totalorder %s33, 0
      %p231 = por %p229, %p230
      %p232 = scmp.ne.s32.totalorder %s224, %s226
      %p233 = scmp.eq.s32.totalorder %s38, 1
      %p234 = por %p232, %p233
      %p235 = scmp.ne.s32.totalorder %s226, %s227
      %p236 = scmp.eq.s32.totalorder %s38, 0
      %p237 = por %p235, %p236
      %p238 = scmp.ne.s32.totalorder %s226, %s227
      %p239 = scmp.eq.s32.totalorder %s39, 1
      %p240 = por %p238, %p239
      %p242 = scmp.ne.s32.totalorder %s227, %s241
      %p243 = scmp.eq.s32.totalorder %s39, 0
      %p244 = por %p242, %p243
      %s246 = sadd.s32 %s245, 1
      %p249 = scmp.eq.s32.totalorder %s33, 1
      %p250 = scmp.ne.s32.totalorder %s245, %s247
      %p251 = scmp.eq.s32.totalorder %s33, 0
      %p252 = por %p250, %p251
      %p253 = scmp.ne.s32.totalorder %s245, %s247
      %p254 = scmp.eq.s32.totalorder %s38, 1
      %p255 = por %p253, %p254
      %p256 = scmp.ne.s32.totalorder %s247, %s248
      %p257 = scmp.eq.s32.totalorder %s38, 0
      %p258 = por %p256, %p257
      %p259 = scmp.ne.s32.totalorder %s247, %s248
      %p260 = scmp.eq.s32.totalorder %s39, 1
      %p261 = por %p259, %p260
      %p263 = scmp.ne.s32.totalorder %s248, %s262
      %p264 = scmp.eq.s32.totalorder %s39, 0
      %p265 = por %p263, %p264
      %s267 = sadd.s32 %s266, 1
      %p270 = scmp.eq.s32.totalorder %s33, 1
      %p271 = scmp.ne.s32.totalorder %s266, %s268
      %p272 = scmp.eq.s32.totalorder %s33, 0
      %p273 = por %p271, %p272
      %p274 = scmp.ne.s32.totalorder %s266, %s268
      %p275 = scmp.eq.s32.totalorder %s38, 1
      %p276 = por %p274, %p275
      %p277 = scmp.ne.s32.totalorder %s268, %s269
      %p278 = scmp.eq.s32.totalorder %s38, 0
      %p279 = por %p277, %p278
      %p280 = scmp.ne.s32.totalorder %s268, %s269
      %p281 = scmp.eq.s32.totalorder %s39, 1
      %p282 = por %p280, %p281
      %p284 = scmp.ne.s32.totalorder %s269, %s283
      %p285 = scmp.eq.s32.totalorder %s39, 0
      %p286 = por %p284, %p285
      %s287 = ssub.s32 %s33, %s40
      %p288 = scmp.eq.s32.totalorder %s287, 0
      %s290 = sadd.s32 %s289, 1
      %s291 = scalar_select %p288, %s289, %s290
      %p294 = pneg %p288
      %p295 = scmp.eq.s32.totalorder %s33, 1
      %p296 = por %p294, %p295
      %p297 = scmp.ne.s32.totalorder %s289, %s292
      %p298 = scmp.eq.s32.totalorder %s33, 0
      %p299 = por %p297, %p298
      %p300 = scmp.ne.s32.totalorder %s289, %s292
      %p301 = scmp.eq.s32.totalorder %s38, 1
      %p302 = por %p300, %p301
      %p303 = scmp.ne.s32.totalorder %s292, %s293
      %p304 = scmp.eq.s32.totalorder %s38, 0
      %p305 = por %p303, %p304
      %p306 = scmp.ne.s32.totalorder %s292, %s293
      %p307 = scmp.eq.s32.totalorder %s39, 1
      %p308 = por %p306, %p307
      %p310 = scmp.ne.s32.totalorder %s293, %s309
      %p311 = scmp.eq.s32.totalorder %s39, 0
      %p312 = por %p310, %p311
      %s313 = ssub.s32 %s33, %s40
      %p314 = scmp.eq.s32.totalorder %s313, 0
      %s316 = sadd.s32 %s315, 1
      %s317 = scalar_select %p314, %s315, %s316
      %p320 = pneg %p314
      %p321 = scmp.eq.s32.totalorder %s33, 1
      %p322 = por %p320, %p321
      %p323 = scmp.ne.s32.totalorder %s315, %s318
      %p324 = scmp.eq.s32.totalorder %s33, 0
      %p325 = por %p323, %p324
      %p326 = scmp.ne.s32.totalorder %s315, %s318
      %p327 = scmp.eq.s32.totalorder %s38, 1
      %p328 = por %p326, %p327
      %p329 = scmp.ne.s32.totalorder %s318, %s319
      %p330 = scmp.eq.s32.totalorder %s38, 0
      %p331 = por %p329, %p330
      %p332 = scmp.ne.s32.totalorder %s318, %s319
      %p333 = scmp.eq.s32.totalorder %s39, 1
      %p334 = por %p332, %p333
      %p336 = scmp.ne.s32.totalorder %s319, %s335
      %p337 = scmp.eq.s32.totalorder %s39, 0
      %p338 = por %p336, %p337
      %p339 = scmp.le.s32.totalorder 1, %s33
      %p340 = scmp.lt.s32.totalorder %s33, 3
      %p341 = pnand %p339, %p340
      %p342 = pneg %p341
      // Predicated region
      $region9: #{tpu_custom_call.1} parent=5 // pred_check
        _
      $region10: #{tpu_custom_call.1} parent=5 // pred_check_branch
        %344 = sbr.rel (%p341) target = $region12
      $region11: #{tpu_custom_call.1} parent=5 // pred_region
        %s345 = ssub.s32 %s33, 1
        // Predicated region
        $region13: #{tpu_custom_call.1} parent=11 // pred_check
          %p346 = pneg %p132
        $region14: #{tpu_custom_call.1} parent=11 // pred_check_branch
          %348 = sbr.rel (%p346) target = $region16
        $region15: #{tpu_custom_call.1} parent=11 // pred_region
          %s350 = ssub.s32 256, 256
          %351 = vsyncadd [#allocation10], %s350
          %s352 = sshll.u32 [#allocation9], 4
          %s353 = int_to_ptr.vmem [resolvable:$true] %s352
          %358 = dma.hbm_to_vmem [thread:$0]  %s3, 256, %s353, [#allocation10], 64, 64, 4
        $region16: #{tpu_custom_call.1} parent=11 // pred_fallthru
          _
        // Predicated region
        $region17: #{tpu_custom_call.1} parent=11 // pred_check
          %p359 = pneg %p153
        $region18: #{tpu_custom_call.1} parent=11 // pred_check_branch
          %361 = sbr.rel (%p359) target = $region20
        $region19: #{tpu_custom_call.1} parent=11 // pred_region
          %s363 = ssub.s32 256, 256
          %364 = vsyncadd [#allocation10], %s363
          %s365 = sshll.u32 [#allocation11], 4
          %s366 = int_to_ptr.vmem [resolvable:$true] %s365
          %371 = dma.hbm_to_vmem [thread:$0]  %s4, 256, %s366, [#allocation10], 64, 64, 4
        $region20: #{tpu_custom_call.1} parent=11 // pred_fallthru
          _
        // Predicated region
        $region21: #{tpu_custom_call.1} parent=11 // pred_check
          %p372 = pneg %p174
        $region22: #{tpu_custom_call.1} parent=11 // pred_check_branch
          %374 = sbr.rel (%p372) target = $region24
        $region23: #{tpu_custom_call.1} parent=11 // pred_region
          %s376 = ssub.s32 256, 256
          %377 = vsyncadd [#allocation13], %s376
          %s378 = sshll.u32 [#allocation12], 4
          %s379 = int_to_ptr.vmem [resolvable:$true] %s378
          %384 = dma.hbm_to_vmem [thread:$0]  %s5, 256, %s379, [#allocation13], 64, 64, 4
        $region24: #{tpu_custom_call.1} parent=11 // pred_fallthru
          _
        // Predicated region
        $region25: #{tpu_custom_call.1} parent=11 // pred_check
          %p385 = pneg %p195
        $region26: #{tpu_custom_call.1} parent=11 // pred_check_branch
          %387 = sbr.rel (%p385) target = $region28
        $region27: #{tpu_custom_call.1} parent=11 // pred_region
          %s389 = ssub.s32 256, 256
          %390 = vsyncadd [#allocation13], %s389
          %s391 = sshll.u32 [#allocation14], 4
          %s392 = int_to_ptr.vmem [resolvable:$true] %s391
          %397 = dma.hbm_to_vmem [thread:$0]  %s6, 256, %s392, [#allocation13], 64, 64, 4
        $region28: #{tpu_custom_call.1} parent=11 // pred_fallthru
          _
        // Predicated region
        $region29: #{tpu_custom_call.1} parent=11 // pred_check
          %p398 = pneg %p216
        $region30: #{tpu_custom_call.1} parent=11 // pred_check_branch
          %400 = sbr.rel (%p398) target = $region32
        $region31: #{tpu_custom_call.1} parent=11 // pred_region
          _
        $region32: #{tpu_custom_call.1} parent=11 // pred_fallthru
          _
        // Predicated region
        $region33: #{tpu_custom_call.1} parent=11 // pred_check
          %p401 = pneg %p237
        $region34: #{tpu_custom_call.1} parent=11 // pred_check_branch
          %403 = sbr.rel (%p401) target = $region36
        $region35: #{tpu_custom_call.1} parent=11 // pred_region
          _
        $region36: #{tpu_custom_call.1} parent=11 // pred_fallthru
          _
        // Predicated region
        $region37: #{tpu_custom_call.1} parent=11 // pred_check
          %p404 = pneg %p258
        $region38: #{tpu_custom_call.1} parent=11 // pred_check_branch
          %406 = sbr.rel (%p404) target = $region40
        $region39: #{tpu_custom_call.1} parent=11 // pred_region
          _
        $region40: #{tpu_custom_call.1} parent=11 // pred_fallthru
          _
        // Predicated region
        $region41: #{tpu_custom_call.1} parent=11 // pred_check
          %p407 = pneg %p279
        $region42: #{tpu_custom_call.1} parent=11 // pred_check_branch
          %409 = sbr.rel (%p407) target = $region44
        $region43: #{tpu_custom_call.1} parent=11 // pred_region
          _
        $region44: #{tpu_custom_call.1} parent=11 // pred_fallthru
          _
      $region12: #{tpu_custom_call.1} parent=5 // pred_fallthru
        _
      %p410 = scmp.lt.s32.totalorder %s33, 2
      // Predicated region
      $region45: #{tpu_custom_call.1} parent=5 // pred_check
        %p411 = pneg %p410
      $region46: #{tpu_custom_call.1} parent=5 // pred_check_branch
        %413 = sbr.rel (%p411) target = $region48
      $region47: #{tpu_custom_call.1} parent=5 // pred_region
        // Predicated region
        $region49: #{tpu_custom_call.1} parent=47 // pred_check
          %p414 = pneg %p53
        $region50: #{tpu_custom_call.1} parent=47 // pred_check_branch
          %416 = sbr.rel (%p414) target = $region52
        $region51: #{tpu_custom_call.1} parent=47 // pred_region
          %s417 = sand.u32 %s43, 1
          %s418 = scalar_lea.sflag [#allocation4], %s417
          %s419 = sand.u32 %s43, 1
          %s420 = smul.addr %s419, 4
          %s421 = scalar_lea.vmem [#allocation3], %s420
          %s423 = ssub.s32 64, 64
          %424 = vsyncadd %s418, %s423
          %s425 = smul.addr %s33, 64
          %s426 = scalar_lea.hbm %s0, %s425
          %s428 = sshll.u32 %s421, 4
          %s429 = int_to_ptr.vmem [resolvable:$true] %s428
          %431 = dma.hbm_to_vmem [thread:$0]  %s426, 64, %s429, %s418
        $region52: #{tpu_custom_call.1} parent=47 // pred_fallthru
          _
        // Predicated region
        $region53: #{tpu_custom_call.1} parent=47 // pred_check
          %p432 = pneg %p79
        $region54: #{tpu_custom_call.1} parent=47 // pred_check_branch
          %434 = sbr.rel (%p432) target = $region56
        $region55: #{tpu_custom_call.1} parent=47 // pred_region
          %s435 = sand.u32 %s33, 1
          %s436 = scalar_lea.sflag [#allocation7], %s435
          %s437 = sand.u32 %s69, 1
          %s438 = smul.addr %s437, 4
          %s439 = scalar_lea.vmem [#allocation6], %s438
          %s441 = ssub.s32 64, 64
          %442 = vsyncadd %s436, %s441
          %s443 = smul.addr %s33, 64
          %s444 = scalar_lea.hbm %s1, %s443
          %s446 = sshll.u32 %s439, 4
          %s447 = int_to_ptr.vmem [resolvable:$true] %s446
          %449 = dma.hbm_to_vmem [thread:$0]  %s444, 64, %s447, %s436
        $region56: #{tpu_custom_call.1} parent=47 // pred_fallthru
          _
        // Predicated region
        $region57: #{tpu_custom_call.1} parent=47 // pred_check
          %p450 = pneg %p105
        $region58: #{tpu_custom_call.1} parent=47 // pred_check_branch
          %452 = sbr.rel (%p450) target = $region60
        $region59: #{tpu_custom_call.1} parent=47 // pred_region
          %s453 = sand.u32 %s33, 1
          %s454 = scalar_lea.sflag [#allocation7], %s453
          %s455 = sand.u32 %s95, 1
          %s456 = smul.addr %s455, 4
          %s457 = scalar_lea.vmem [#allocation8], %s456
          %s459 = ssub.s32 64, 64
          %460 = vsyncadd %s454, %s459
          %s461 = smul.addr %s33, 64
          %s462 = scalar_lea.hbm %s2, %s461
          %s464 = sshll.u32 %s457, 4
          %s465 = int_to_ptr.vmem [resolvable:$true] %s464
          %467 = dma.hbm_to_vmem [thread:$0]  %s462, 64, %s465, %s454
        $region60: #{tpu_custom_call.1} parent=47 // pred_fallthru
          _
      $region48: #{tpu_custom_call.1} parent=5 // pred_fallthru
        _
      %p468 = scmp.le.s32.totalorder 1, %s33
      %p469 = scmp.lt.s32.totalorder %s33, 3
      %p470 = pnand %p468, %p469
      %p471 = pneg %p470
      // Predicated region
      $region61: #{tpu_custom_call.1} parent=5 // pred_check
        _
      $region62: #{tpu_custom_call.1} parent=5 // pred_check_branch
        %473 = sbr.rel (%p470) target = $region64
      $region63: #{tpu_custom_call.1} parent=5 // pred_region
        %s474 = ssub.s32 %s33, 1
        %s475 = sand.u32 %s46, 1
        %s476 = scalar_lea.sflag [#allocation4], %s475
        %s477 = sand.u32 %s46, 1
        %s478 = smul.addr %s477, 4
        %s479 = scalar_lea.vmem [#allocation3], %s478
        // Predicated region
        $region65: #{tpu_custom_call.1} parent=63 // pred_check
          %p480 = pneg %p59
        $region66: #{tpu_custom_call.1} parent=63 // pred_check_branch
          %482 = sbr.rel (%p480) target = $region68
        $region67: #{tpu_custom_call.1} parent=63 // pred_region
          %483 = dma.done %s476, 64
        $region68: #{tpu_custom_call.1} parent=63 // pred_fallthru
          _
        %s484 = sand.u32 %s38, 1
        %s485 = scalar_lea.sflag [#allocation7], %s484
        %s486 = sand.u32 %s72, 1
        %s487 = smul.addr %s486, 4
        %s488 = scalar_lea.vmem [#allocation6], %s487
        // Predicated region
        $region69: #{tpu_custom_call.1} parent=63 // pred_check
          %p489 = pneg %p85
        $region70: #{tpu_custom_call.1} parent=63 // pred_check_branch
          %491 = sbr.rel (%p489) target = $region72
        $region71: #{tpu_custom_call.1} parent=63 // pred_region
          %492 = dma.done %s485, 64
        $region72: #{tpu_custom_call.1} parent=63 // pred_fallthru
          _
        %s493 = sand.u32 %s38, 1
        %s494 = scalar_lea.sflag [#allocation7], %s493
        %s495 = sand.u32 %s98, 1
        %s496 = smul.addr %s495, 4
        %s497 = scalar_lea.vmem [#allocation8], %s496
        // Predicated region
        $region73: #{tpu_custom_call.1} parent=63 // pred_check
          %p498 = pneg %p111
        $region74: #{tpu_custom_call.1} parent=63 // pred_check_branch
          %500 = sbr.rel (%p498) target = $region76
        $region75: #{tpu_custom_call.1} parent=63 // pred_region
          %501 = dma.done %s494, 64
        $region76: #{tpu_custom_call.1} parent=63 // pred_fallthru
          _
        // Predicated region
        $region77: #{tpu_custom_call.1} parent=63 // pred_check
          %p502 = pneg %p132
        $region78: #{tpu_custom_call.1} parent=63 // pred_check_branch
          %504 = sbr.rel (%p502) target = $region80
        $region79: #{tpu_custom_call.1} parent=63 // pred_region
          %505 = dma.done [#allocation10], 256
        $region80: #{tpu_custom_call.1} parent=63 // pred_fallthru
          _
        // Predicated region
        $region81: #{tpu_custom_call.1} parent=63 // pred_check
          %p506 = pneg %p153
        $region82: #{tpu_custom_call.1} parent=63 // pred_check_branch
          %508 = sbr.rel (%p506) target = $region84
        $region83: #{tpu_custom_call.1} parent=63 // pred_region
          %509 = dma.done [#allocation10], 256
        $region84: #{tpu_custom_call.1} parent=63 // pred_fallthru
          _
        // Predicated region
        $region85: #{tpu_custom_call.1} parent=63 // pred_check
          %p510 = pneg %p174
        $region86: #{tpu_custom_call.1} parent=63 // pred_check_branch
          %512 = sbr.rel (%p510) target = $region88
        $region87: #{tpu_custom_call.1} parent=63 // pred_region
          %513 = dma.done [#allocation13], 256
        $region88: #{tpu_custom_call.1} parent=63 // pred_fallthru
          _
        // Predicated region
        $region89: #{tpu_custom_call.1} parent=63 // pred_check
          %p514 = pneg %p195
        $region90: #{tpu_custom_call.1} parent=63 // pred_check_branch
          %516 = sbr.rel (%p514) target = $region92
        $region91: #{tpu_custom_call.1} parent=63 // pred_region
          %517 = dma.done [#allocation13], 256
        $region92: #{tpu_custom_call.1} parent=63 // pred_fallthru
          _
        %s518 = sand.u32 %s46, 1
        %s519 = scalar_lea.sflag [#allocation4], %s518
        %s520 = sand.u32 %s46, 1
        %s521 = smul.addr %s520, 4
        %s522 = scalar_lea.vmem [#allocation3], %s521
        %p523 = pneg %p59
        %p524 = pneg %p56
        %s525 = sand.u32 %s38, 1
        %s526 = scalar_lea.sflag [#allocation7], %s525
        %s527 = sand.u32 %s72, 1
        %s528 = smul.addr %s527, 4
        %s529 = scalar_lea.vmem [#allocation6], %s528
        %p530 = pneg %p85
        %p531 = pneg %p82
        %s532 = sand.u32 %s38, 1
        %s533 = scalar_lea.sflag [#allocation7], %s532
        %s534 = sand.u32 %s98, 1
        %s535 = smul.addr %s534, 4
        %s536 = scalar_lea.vmem [#allocation8], %s535
        %p537 = pneg %p111
        %p538 = pneg %p108
        %p539 = pneg %p132
        %p540 = pneg %p129
        %p541 = pneg %p153
        %p542 = pneg %p150
        %p543 = pneg %p174
        %p544 = pneg %p171
        %p545 = pneg %p195
        %p546 = pneg %p192
        %p547 = pneg %p216
        %p548 = pneg %p213
        %p549 = pneg %p237
        %p550 = pneg %p234
        %p551 = pneg %p258
        %p552 = pneg %p255
        %p553 = pneg %p279
        %p554 = pneg %p276
        %p555 = pneg %p305
        %p556 = pneg %p302
        %s557 = sand.u32 %s292, 1
        %s558 = scalar_lea.sflag [#allocation5], %s557
        %s559 = sand.u32 %s292, 1
        %s560 = smul.addr %s559, 8
        %s561 = scalar_lea.vmem [#allocation15], %s560
        %p562 = pneg %p331
        %p563 = pneg %p328
        %s564 = sand.u32 %s318, 1
        %s565 = scalar_lea.sflag [#allocation17], %s564
        %s566 = sand.u32 %s318, 1
        %s567 = smul.addr %s566, 8
        %s568 = scalar_lea.vmem [#allocation16], %s567
        %v570 = vld [vmem:[%s479] sm:$0xf]
        %v571 = vld [vmem:[%s488] sm:$0xf]
        %v572 = vld [vmem:[%s497] sm:$0xf]
        %v573 = vld [vmem:[#allocation9] sm:$0xf]
        %v574 = vld [vmem:[#allocation9 + $0x4] sm:$0xf]
        %v575 = vld [vmem:[#allocation9 + $0x8] sm:$0xf]
        %v576 = vld [vmem:[#allocation9 + $0xc] sm:$0xf]
        %v577 = vld [vmem:[%s7] sm:$0x1]
        %v579 = vlaneseq
        %v580 = vshrl.u32 %v579, 7
        %v581 = vsub.s32 0, %v580
        %v582 = vrot.slane %v577, %v581
        %v588 = vunpack.c.l.b16 %v573
        %v589 = vunpack.c.l.b16 %v574
        %v590 = vunpack.c.l.b16 %v575
        %v591 = vunpack.c.l.b16 %v576
        %v592 = vpack.c.b16 %v589, %v588
        %v593 = vpack.c.b16 %v591, %v590
        %vm596 = vcmask 261120
        %v598 = vsel %vm596, %v570, 0
        %600 = vmatprep.subr.bf16.mxu0 0
        %601 = vmatpush1.bf16.msra.mxu0 0
        %602 = vmatprep.subr.bf16.mxu0 0
        %603 = vmatpush1.bf16.msra.mxu0 0
        %604 = vmatprep.subr.bf16.mxu0 0
        %605 = vmatpush1.bf16.msra.mxu0 0
        %606 = vmatprep.subr.bf16.mxu0 0
        %607 = vmatpush1.bf16.msra.mxu0 0
        %608 = vmatprep.subr.bf16.mxu0 0
        %609 = vmatpush1.bf16.msra.mxu0 0
        %610 = vmatprep.subr.bf16.mxu0 0
        %611 = vmatpush1.bf16.msra.mxu0 0
        %612 = vmatprep.subr.bf16.mxu0 0
        %613 = vmatpush1.bf16.msra.mxu0 %v593
        %614 = vmatprep.subr.bf16.mxu0 0
        %615 = vmatpush1.bf16.msra.mxu0 %v592
        %616 = vmatprep.subr.bf16.mxu0 0
        %617 = vmatpush2.bf16.msra.mxu0 0
        %618 = vmatprep.subr.bf16.mxu0 0
        %619 = vmatpush2.bf16.msra.mxu0 0
        %620 = vmatprep.subr.bf16.mxu0 0
        %621 = vmatpush2.bf16.msra.mxu0 0
        %622 = vmatprep.subr.bf16.mxu0 0
        %623 = vmatpush2.bf16.msra.mxu0 0
        %624 = vmatprep.subr.bf16.mxu0 0
        %625 = vmatpush2.bf16.msra.mxu0 0
        %626 = vmatprep.subr.bf16.mxu0 0
        %627 = vmatpush2.bf16.msra.mxu0 0
        %628 = vmatprep.subr.bf16.mxu0 0
        %629 = vmatpush2.bf16.msra.mxu0 0
        %630 = vmatprep.subr.bf16.mxu0 0
        %631 = vmatpush2.bf16.msra.mxu0 0
        %632 = vmatprep.mubr.bf16.mxu0 0
        %633 = vmatmul.mubr.bf16.gmra.mxu0 %v598
        %v634 = vpop.f32.mrf.mxu0
        %v635 = vadd.f32 %v582, %v634
        %v636 = vpop.f32.mrf.mxu0
        %v637 = vpop.f32.mrf.mxu0
        %v638 = vpop.f32.mrf.mxu0
        %639 = vdwg.mxu0
        %v640 = vpack.c.bf16 %v635, %v635
        %v641 = vld [vmem:[#allocation11] sm:$0xf]
        %v642 = vld [vmem:[#allocation11 + $0x4] sm:$0xf]
        %v643 = vld [vmem:[#allocation11 + $0x8] sm:$0xf]
        %v644 = vld [vmem:[#allocation11 + $0xc] sm:$0xf]
        %v645 = vld [vmem:[%s8] sm:$0x1]
        %v647 = vlaneseq
        %v648 = vshrl.u32 %v647, 7
        %v649 = vsub.s32 0, %v648
        %v650 = vrot.slane %v645, %v649
        %v656 = vunpack.c.l.b16 %v641
        %v657 = vunpack.c.l.b16 %v642
        %v658 = vunpack.c.l.b16 %v643
        %v659 = vunpack.c.l.b16 %v644
        %v660 = vpack.c.b16 %v657, %v656
        %v661 = vpack.c.b16 %v659, %v658
        %v665 = vsel %vm596, %v571, 0
        %667 = vmatprep.subr.bf16.mxu0 0
        %668 = vmatpush1.bf16.msra.mxu0 0
        %669 = vmatprep.subr.bf16.mxu0 0
        %670 = vmatpush1.bf16.msra.mxu0 0
        %671 = vmatprep.subr.bf16.mxu0 0
        %672 = vmatpush1.bf16.msra.mxu0 0
        %673 = vmatprep.subr.bf16.mxu0 0
        %674 = vmatpush1.bf16.msra.mxu0 0
        %675 = vmatprep.subr.bf16.mxu0 0
        %676 = vmatpush1.bf16.msra.mxu0 0
        %677 = vmatprep.subr.bf16.mxu0 0
        %678 = vmatpush1.bf16.msra.mxu0 0
        %679 = vmatprep.subr.bf16.mxu0 0
        %680 = vmatpush1.bf16.msra.mxu0 %v661
        %681 = vmatprep.subr.bf16.mxu0 0
        %682 = vmatpush1.bf16.msra.mxu0 %v660
        %683 = vmatprep.subr.bf16.mxu0 0
        %684 = vmatpush2.bf16.msra.mxu0 0
        %685 = vmatprep.subr.bf16.mxu0 0
        %686 = vmatpush2.bf16.msra.mxu0 0
        %687 = vmatprep.subr.bf16.mxu0 0
        %688 = vmatpush2.bf16.msra.mxu0 0
        %689 = vmatprep.subr.bf16.mxu0 0
        %690 = vmatpush2.bf16.msra.mxu0 0
        %691 = vmatprep.subr.bf16.mxu0 0
        %692 = vmatpush2.bf16.msra.mxu0 0
        %693 = vmatprep.subr.bf16.mxu0 0
        %694 = vmatpush2.bf16.msra.mxu0 0
        %695 = vmatprep.subr.bf16.mxu0 0
        %696 = vmatpush2.bf16.msra.mxu0 0
        %697 = vmatprep.subr.bf16.mxu0 0
        %698 = vmatpush2.bf16.msra.mxu0 0
        %699 = vmatprep.mubr.bf16.mxu0 0
        %700 = vmatmul.mubr.bf16.gmra.mxu0 %v665
        %v701 = vpop.f32.mrf.mxu0
        %v702 = vadd.f32 %v650, %v701
        %v703 = vpop.f32.mrf.mxu0
        %v704 = vpop.f32.mrf.mxu0
        %v705 = vpop.f32.mrf.mxu0
        %706 = vdwg.mxu0
        %v707 = vpack.c.bf16 %v702, %v702
        %v708 = vld [vmem:[#allocation12] sm:$0xf]
        %v709 = vld [vmem:[#allocation12 + $0x4] sm:$0xf]
        %v710 = vld [vmem:[#allocation12 + $0x8] sm:$0xf]
        %v711 = vld [vmem:[#allocation12 + $0xc] sm:$0xf]
        %v712 = vld [vmem:[%s9] sm:$0x1]
        %v714 = vlaneseq
        %v715 = vshrl.u32 %v714, 7
        %v716 = vsub.s32 0, %v715
        %v717 = vrot.slane %v712, %v716
        %v723 = vunpack.c.l.b16 %v708
        %v724 = vunpack.c.l.b16 %v709
        %v725 = vunpack.c.l.b16 %v710
        %v726 = vunpack.c.l.b16 %v711
        %v727 = vpack.c.b16 %v724, %v723
        %v728 = vpack.c.b16 %v726, %v725
        %v732 = vsel %vm596, %v572, 0
        %734 = vmatprep.subr.bf16.mxu0 0
        %735 = vmatpush1.bf16.msra.mxu0 0
        %736 = vmatprep.subr.bf16.mxu0 0
        %737 = vmatpush1.bf16.msra.mxu0 0
        %738 = vmatprep.subr.bf16.mxu0 0
        %739 = vmatpush1.bf16.msra.mxu0 0
        %740 = vmatprep.subr.bf16.mxu0 0
        %741 = vmatpush1.bf16.msra.mxu0 0
        %742 = vmatprep.subr.bf16.mxu0 0
        %743 = vmatpush1.bf16.msra.mxu0 0
        %744 = vmatprep.subr.bf16.mxu0 0
        %745 = vmatpush1.bf16.msra.mxu0 0
        %746 = vmatprep.subr.bf16.mxu0 0
        %747 = vmatpush1.bf16.msra.mxu0 %v728
        %748 = vmatprep.subr.bf16.mxu0 0
        %749 = vmatpush1.bf16.msra.mxu0 %v727
        %750 = vmatprep.subr.bf16.mxu0 0
        %751 = vmatpush2.bf16.msra.mxu0 0
        %752 = vmatprep.subr.bf16.mxu0 0
        %753 = vmatpush2.bf16.msra.mxu0 0
        %754 = vmatprep.subr.bf16.mxu0 0
        %755 = vmatpush2.bf16.msra.mxu0 0
        %756 = vmatprep.subr.bf16.mxu0 0
        %757 = vmatpush2.bf16.msra.mxu0 0
        %758 = vmatprep.subr.bf16.mxu0 0
        %759 = vmatpush2.bf16.msra.mxu0 0
        %760 = vmatprep.subr.bf16.mxu0 0
        %761 = vmatpush2.bf16.msra.mxu0 0
        %762 = vmatprep.subr.bf16.mxu0 0
        %763 = vmatpush2.bf16.msra.mxu0 0
        %764 = vmatprep.subr.bf16.mxu0 0
        %765 = vmatpush2.bf16.msra.mxu0 0
        %766 = vmatprep.mubr.bf16.mxu0 0
        %767 = vmatmul.mubr.bf16.gmra.mxu0 %v732
        %v768 = vpop.f32.mrf.mxu0
        %v769 = vadd.f32 %v717, %v768
        %v770 = vpop.f32.mrf.mxu0
        %v771 = vpop.f32.mrf.mxu0
        %v772 = vpop.f32.mrf.mxu0
        %773 = vdwg.mxu0
        %v774 = vpack.c.bf16 %v769, %v769
        %vm775 = vcmask 64512
        %v777 = vsel %vm775, %v640, 0
        %v780 = vsel %vm775, %v707, 0
        %782 = vmatprep.subr.bf16.mxu0 0
        %783 = vmatpush1.bf16.xpose.msra.mxu0 0
        %784 = vmatprep.subr.bf16.mxu0 0
        %785 = vmatpush1.bf16.xpose.msra.mxu0 0
        %786 = vmatprep.subr.bf16.mxu0 0
        %787 = vmatpush1.bf16.xpose.msra.mxu0 0
        %788 = vmatprep.subr.bf16.mxu0 0
        %789 = vmatpush1.bf16.xpose.msra.mxu0 0
        %790 = vmatprep.subr.bf16.mxu0 0
        %791 = vmatpush1.bf16.xpose.msra.mxu0 0
        %792 = vmatprep.subr.bf16.mxu0 0
        %793 = vmatpush1.bf16.xpose.msra.mxu0 0
        %794 = vmatprep.subr.bf16.mxu0 0
        %795 = vmatpush1.bf16.xpose.msra.mxu0 0
        %796 = vmatprep.subr.bf16.mxu0 0
        %797 = vmatpush1.bf16.xpose.msra.mxu0 %v780
        %798 = vmatprep.subr.bf16.mxu0 0
        %799 = vmatpush2.bf16.xpose.msra.mxu0 0
        %800 = vmatprep.subr.bf16.mxu0 0
        %801 = vmatpush2.bf16.xpose.msra.mxu0 0
        %802 = vmatprep.subr.bf16.mxu0 0
        %803 = vmatpush2.bf16.xpose.msra.mxu0 0
        %804 = vmatprep.subr.bf16.mxu0 0
        %805 = vmatpush2.bf16.xpose.msra.mxu0 0
        %806 = vmatprep.subr.bf16.mxu0 0
        %807 = vmatpush2.bf16.xpose.msra.mxu0 0
        %808 = vmatprep.subr.bf16.mxu0 0
        %809 = vmatpush2.bf16.xpose.msra.mxu0 0
        %810 = vmatprep.subr.bf16.mxu0 0
        %811 = vmatpush2.bf16.xpose.msra.mxu0 0
        %812 = vmatprep.subr.bf16.mxu0 0
        %813 = vmatpush2.bf16.xpose.msra.mxu0 0
        %814 = vmatprep.mubr.bf16.mxu0 0
        %815 = vmatmul.mubr.bf16.gmra.mxu0 %v777
        %v816 = vpop.f32.mrf.mxu0
        %v817 = vadd.f32 0.0, %v816
        %v818 = vpop.f32.mrf.mxu0
        %v819 = vpop.f32.mrf.mxu0
        %v820 = vpop.f32.mrf.mxu0
        %821 = vdwg.mxu0
        %v822 = vsel %vm775, %v817, -inf
        %823 = vmax.xlane.f32.xlu0 %v822
        %v824 = vpop.xlane.xlu0 %823
        %v825 = vsub.f32 %v817, %v824
        %v826 = vmul.f32 %v825, 1.442695
        %v827 = vpow.pop %v826
        %v828 = vsel %vm775, %v827, 0.0
        %829 = vadd.xlane.f32.xlu0 %v828
        %v830 = vpop.xlane.xlu0 %829
        %v831 = vrcp.pop %v830
        %v832 = vmul.f32 %v827, %v831
        %v833 = vmul.f32 %v832, 0.25
        %834 = vst.msk [vmem:[%s568] sm:$0xff] %vm775, %v833
        %v835 = vpack.c.bf16 %v832, %v832
        %v837 = vsel %vm775, %v835, 0
        %vm839 = vcmask 1043456
        %v841 = vsel %vm839, %v774, 0
        %843 = vmatprep.subr.bf16.mxu0 0
        %844 = vmatpush1.bf16.msra.mxu0 0
        %845 = vmatprep.subr.bf16.mxu0 0
        %846 = vmatpush1.bf16.msra.mxu0 0
        %847 = vmatprep.subr.bf16.mxu0 0
        %848 = vmatpush1.bf16.msra.mxu0 0
        %849 = vmatprep.subr.bf16.mxu0 0
        %850 = vmatpush1.bf16.msra.mxu0 0
        %851 = vmatprep.subr.bf16.mxu0 0
        %852 = vmatpush1.bf16.msra.mxu0 0
        %853 = vmatprep.subr.bf16.mxu0 0
        %854 = vmatpush1.bf16.msra.mxu0 0
        %855 = vmatprep.subr.bf16.mxu0 0
        %856 = vmatpush1.bf16.msra.mxu0 0
        %857 = vmatprep.subr.bf16.mxu0 0
        %858 = vmatpush1.bf16.msra.mxu0 %v841
        %859 = vmatprep.subr.bf16.mxu0 0
        %860 = vmatpush2.bf16.msra.mxu0 0
        %861 = vmatprep.subr.bf16.mxu0 0
        %862 = vmatpush2.bf16.msra.mxu0 0
        %863 = vmatprep.subr.bf16.mxu0 0
        %864 = vmatpush2.bf16.msra.mxu0 0
        %865 = vmatprep.subr.bf16.mxu0 0
        %866 = vmatpush2.bf16.msra.mxu0 0
        %867 = vmatprep.subr.bf16.mxu0 0
        %868 = vmatpush2.bf16.msra.mxu0 0
        %869 = vmatprep.subr.bf16.mxu0 0
        %870 = vmatpush2.bf16.msra.mxu0 0
        %871 = vmatprep.subr.bf16.mxu0 0
        %872 = vmatpush2.bf16.msra.mxu0 0
        %873 = vmatprep.subr.bf16.mxu0 0
        %874 = vmatpush2.bf16.msra.mxu0 0
        %875 = vmatprep.mubr.bf16.mxu0 0
        %876 = vmatmul.mubr.bf16.gmra.mxu0 %v837
        %v877 = vpop.f32.mrf.mxu0
        %v878 = vadd.f32 0.0, %v877
        %v879 = vpop.f32.mrf.mxu0
        %v880 = vpop.f32.mrf.mxu0
        %v881 = vpop.f32.mrf.mxu0
        %882 = vdwg.mxu0
        %v883 = vpack.c.bf16 %v878, %v878
        %vm884 = vcmask 60416
        %885 = vst.msk [vmem:[#allocation2] sm:$0xf] %vm884, %v883
        %887 = vrot.lane.b32.xlu0 %v640, 120
        %v888 = vpop.permute.xlu0 %887
        %890 = vrot.lane.b32.xlu0 %v707, 120
        %v891 = vpop.permute.xlu0 %890
        %v893 = vsel %vm775, %v888, 0
        %v896 = vsel %vm775, %v891, 0
        %898 = vmatprep.subr.bf16.mxu0 0
        %899 = vmatpush1.bf16.xpose.msra.mxu0 0
        %900 = vmatprep.subr.bf16.mxu0 0
        %901 = vmatpush1.bf16.xpose.msra.mxu0 0
        %902 = vmatprep.subr.bf16.mxu0 0
        %903 = vmatpush1.bf16.xpose.msra.mxu0 0
        %904 = vmatprep.subr.bf16.mxu0 0
        %905 = vmatpush1.bf16.xpose.msra.mxu0 0
        %906 = vmatprep.subr.bf16.mxu0 0
        %907 = vmatpush1.bf16.xpose.msra.mxu0 0
        %908 = vmatprep.subr.bf16.mxu0 0
        %909 = vmatpush1.bf16.xpose.msra.mxu0 0
        %910 = vmatprep.subr.bf16.mxu0 0
        %911 = vmatpush1.bf16.xpose.msra.mxu0 0
        %912 = vmatprep.subr.bf16.mxu0 0
        %913 = vmatpush1.bf16.xpose.msra.mxu0 %v896
        %914 = vmatprep.subr.bf16.mxu0 0
        %915 = vmatpush2.bf16.xpose.msra.mxu0 0
        %916 = vmatprep.subr.bf16.mxu0 0
        %917 = vmatpush2.bf16.xpose.msra.mxu0 0
        %918 = vmatprep.subr.bf16.mxu0 0
        %919 = vmatpush2.bf16.xpose.msra.mxu0 0
        %920 = vmatprep.subr.bf16.mxu0 0
        %921 = vmatpush2.bf16.xpose.msra.mxu0 0
        %922 = vmatprep.subr.bf16.mxu0 0
        %923 = vmatpush2.bf16.xpose.msra.mxu0 0
        %924 = vmatprep.subr.bf16.mxu0 0
        %925 = vmatpush2.bf16.xpose.msra.mxu0 0
        %926 = vmatprep.subr.bf16.mxu0 0
        %927 = vmatpush2.bf16.xpose.msra.mxu0 0
        %928 = vmatprep.subr.bf16.mxu0 0
        %929 = vmatpush2.bf16.xpose.msra.mxu0 0
        %930 = vmatprep.mubr.bf16.mxu0 0
        %931 = vmatmul.mubr.bf16.gmra.mxu0 %v893
        %v932 = vpop.f32.mrf.mxu0
        %v933 = vadd.f32 0.0, %v932
        %v934 = vpop.f32.mrf.mxu0
        %v935 = vpop.f32.mrf.mxu0
        %v936 = vpop.f32.mrf.mxu0
        %937 = vdwg.mxu0
        %v938 = vsel %vm775, %v933, -inf
        %939 = vmax.xlane.f32.xlu0 %v938
        %v940 = vpop.xlane.xlu0 %939
        %v941 = vsub.f32 %v933, %v940
        %v942 = vmul.f32 %v941, 1.442695
        %v943 = vpow.pop %v942
        %v944 = vsel %vm775, %v943, 0.0
        %945 = vadd.xlane.f32.xlu0 %v944
        %v946 = vpop.xlane.xlu0 %945
        %v947 = vrcp.pop %v946
        %v948 = vmul.f32 %v943, %v947
        %v949 = vld [vmem:[%s568] sm:$0xff]
        %v950 = vmul.f32 %v948, 0.25
        %v951 = vadd.f32 %v949, %v950
        %952 = vst.msk [vmem:[%s568] sm:$0xff] %vm775, %v951
        %v953 = vpack.c.bf16 %v948, %v948
        %955 = vrot.lane.b32.xlu0 %v774, 120
        %v956 = vpop.permute.xlu0 %955
        %v958 = vsel %vm775, %v953, 0
        %v961 = vsel %vm839, %v956, 0
        %963 = vmatprep.subr.bf16.mxu0 0
        %964 = vmatpush1.bf16.msra.mxu0 0
        %965 = vmatprep.subr.bf16.mxu0 0
        %966 = vmatpush1.bf16.msra.mxu0 0
        %967 = vmatprep.subr.bf16.mxu0 0
        %968 = vmatpush1.bf16.msra.mxu0 0
        %969 = vmatprep.subr.bf16.mxu0 0
        %970 = vmatpush1.bf16.msra.mxu0 0
        %971 = vmatprep.subr.bf16.mxu0 0
        %972 = vmatpush1.bf16.msra.mxu0 0
        %973 = vmatprep.subr.bf16.mxu0 0
        %974 = vmatpush1.bf16.msra.mxu0 0
        %975 = vmatprep.subr.bf16.mxu0 0
        %976 = vmatpush1.bf16.msra.mxu0 0
        %977 = vmatprep.subr.bf16.mxu0 0
        %978 = vmatpush1.bf16.msra.mxu0 %v961
        %979 = vmatprep.subr.bf16.mxu0 0
        %980 = vmatpush2.bf16.msra.mxu0 0
        %981 = vmatprep.subr.bf16.mxu0 0
        %982 = vmatpush2.bf16.msra.mxu0 0
        %983 = vmatprep.subr.bf16.mxu0 0
        %984 = vmatpush2.bf16.msra.mxu0 0
        %985 = vmatprep.subr.bf16.mxu0 0
        %986 = vmatpush2.bf16.msra.mxu0 0
        %987 = vmatprep.subr.bf16.mxu0 0
        %988 = vmatpush2.bf16.msra.mxu0 0
        %989 = vmatprep.subr.bf16.mxu0 0
        %990 = vmatpush2.bf16.msra.mxu0 0
        %991 = vmatprep.subr.bf16.mxu0 0
        %992 = vmatpush2.bf16.msra.mxu0 0
        %993 = vmatprep.subr.bf16.mxu0 0
        %994 = vmatpush2.bf16.msra.mxu0 0
        %995 = vmatprep.mubr.bf16.mxu0 0
        %996 = vmatmul.mubr.bf16.gmra.mxu0 %v958
        %v997 = vpop.f32.mrf.mxu0
        %v998 = vadd.f32 0.0, %v997
        %v999 = vpop.f32.mrf.mxu0
        %v1000 = vpop.f32.mrf.mxu0
        %v1001 = vpop.f32.mrf.mxu0
        %1002 = vdwg.mxu0
        %v1003 = vpack.c.bf16 %v998, %v998
        %v1005 = vunpack.c.l.b16 %v1003
        %v1006 = vpack.c.b16 %v1005, %v1005
        %1007 = vrot.lane.b32.xlu0 %v1006, 8
        %v1008 = vpop.permute.xlu0 %1007
        %vm1010 = vcmask 126016
        %1011 = vst.msk [vmem:[#allocation2] sm:$0xf] %vm1010, %v1008
        %1012 = vrot.lane.b32.xlu0 %v640, 112
        %v1013 = vpop.permute.xlu0 %1012
        %1014 = vrot.lane.b32.xlu0 %v707, 112
        %v1015 = vpop.permute.xlu0 %1014
        %v1017 = vsel %vm775, %v1013, 0
        %v1020 = vsel %vm775, %v1015, 0
        %1022 = vmatprep.subr.bf16.mxu0 0
        %1023 = vmatpush1.bf16.xpose.msra.mxu0 0
        %1024 = vmatprep.subr.bf16.mxu0 0
        %1025 = vmatpush1.bf16.xpose.msra.mxu0 0
        %1026 = vmatprep.subr.bf16.mxu0 0
        %1027 = vmatpush1.bf16.xpose.msra.mxu0 0
        %1028 = vmatprep.subr.bf16.mxu0 0
        %1029 = vmatpush1.bf16.xpose.msra.mxu0 0
        %1030 = vmatprep.subr.bf16.mxu0 0
        %1031 = vmatpush1.bf16.xpose.msra.mxu0 0
        %1032 = vmatprep.subr.bf16.mxu0 0
        %1033 = vmatpush1.bf16.xpose.msra.mxu0 0
        %1034 = vmatprep.subr.bf16.mxu0 0
        %1035 = vmatpush1.bf16.xpose.msra.mxu0 0
        %1036 = vmatprep.subr.bf16.mxu0 0
        %1037 = vmatpush1.bf16.xpose.msra.mxu0 %v1020
        %1038 = vmatprep.subr.bf16.mxu0 0
        %1039 = vmatpush2.bf16.xpose.msra.mxu0 0
        %1040 = vmatprep.subr.bf16.mxu0 0
        %1041 = vmatpush2.bf16.xpose.msra.mxu0 0
        %1042 = vmatprep.subr.bf16.mxu0 0
        %1043 = vmatpush2.bf16.xpose.msra.mxu0 0
        %1044 = vmatprep.subr.bf16.mxu0 0
        %1045 = vmatpush2.bf16.xpose.msra.mxu0 0
        %1046 = vmatprep.subr.bf16.mxu0 0
        %1047 = vmatpush2.bf16.xpose.msra.mxu0 0
        %1048 = vmatprep.subr.bf16.mxu0 0
        %1049 = vmatpush2.bf16.xpose.msra.mxu0 0
        %1050 = vmatprep.subr.bf16.mxu0 0
        %1051 = vmatpush2.bf16.xpose.msra.mxu0 0
        %1052 = vmatprep.subr.bf16.mxu0 0
        %1053 = vmatpush2.bf16.xpose.msra.mxu0 0
        %1054 = vmatprep.mubr.bf16.mxu0 0
        %1055 = vmatmul.mubr.bf16.gmra.mxu0 %v1017
        %v1056 = vpop.f32.mrf.mxu0
        %v1057 = vadd.f32 0.0, %v1056
        %v1058 = vpop.f32.mrf.mxu0
        %v1059 = vpop.f32.mrf.mxu0
        %v1060 = vpop.f32.mrf.mxu0
        %1061 = vdwg.mxu0
        %v1062 = vsel %vm775, %v1057, -inf
        %1063 = vmax.xlane.f32.xlu0 %v1062
        %v1064 = vpop.xlane.xlu0 %1063
        %v1065 = vsub.f32 %v1057, %v1064
        %v1066 = vmul.f32 %v1065, 1.442695
        %v1067 = vpow.pop %v1066
        %v1068 = vsel %vm775, %v1067, 0.0
        %1069 = vadd.xlane.f32.xlu0 %v1068
        %v1070 = vpop.xlane.xlu0 %1069
        %v1071 = vrcp.pop %v1070
        %v1072 = vmul.f32 %v1067, %v1071
        %v1073 = vld [vmem:[%s568] sm:$0xff]
        %v1074 = vmul.f32 %v1072, 0.25
        %v1075 = vadd.f32 %v1073, %v1074
        %1076 = vst.msk [vmem:[%s568] sm:$0xff] %vm775, %v1075
        %v1077 = vpack.c.bf16 %v1072, %v1072
        %1078 = vrot.lane.b32.xlu0 %v774, 112
        %v1079 = vpop.permute.xlu0 %1078
        %v1081 = vsel %vm775, %v1077, 0
        %v1084 = vsel %vm839, %v1079, 0
        %1086 = vmatprep.subr.bf16.mxu0 0
        %1087 = vmatpush1.bf16.msra.mxu0 0
        %1088 = vmatprep.subr.bf16.mxu0 0
        %1089 = vmatpush1.bf16.msra.mxu0 0
        %1090 = vmatprep.subr.bf16.mxu0 0
        %1091 = vmatpush1.bf16.msra.mxu0 0
        %1092 = vmatprep.subr.bf16.mxu0 0
        %1093 = vmatpush1.bf16.msra.mxu0 0
        %1094 = vmatprep.subr.bf16.mxu0 0
        %1095 = vmatpush1.bf16.msra.mxu0 0
        %1096 = vmatprep.subr.bf16.mxu0 0
        %1097 = vmatpush1.bf16.msra.mxu0 0
        %1098 = vmatprep.subr.bf16.mxu0 0
        %1099 = vmatpush1.bf16.msra.mxu0 0
        %1100 = vmatprep.subr.bf16.mxu0 0
        %1101 = vmatpush1.bf16.msra.mxu0 %v1084
        %1102 = vmatprep.subr.bf16.mxu0 0
        %1103 = vmatpush2.bf16.msra.mxu0 0
        %1104 = vmatprep.subr.bf16.mxu0 0
        %1105 = vmatpush2.bf16.msra.mxu0 0
        %1106 = vmatprep.subr.bf16.mxu0 0
        %1107 = vmatpush2.bf16.msra.mxu0 0
        %1108 = vmatprep.subr.bf16.mxu0 0
        %1109 = vmatpush2.bf16.msra.mxu0 0
        %1110 = vmatprep.subr.bf16.mxu0 0
        %1111 = vmatpush2.bf16.msra.mxu0 0
        %1112 = vmatprep.subr.bf16.mxu0 0
        %1113 = vmatpush2.bf16.msra.mxu0 0
        %1114 = vmatprep.subr.bf16.mxu0 0
        %1115 = vmatpush2.bf16.msra.mxu0 0
        %1116 = vmatprep.subr.bf16.mxu0 0
        %1117 = vmatpush2.bf16.msra.mxu0 0
        %1118 = vmatprep.mubr.bf16.mxu0 0
        %1119 = vmatmul.mubr.bf16.gmra.mxu0 %v1081
        %v1120 = vpop.f32.mrf.mxu0
        %v1121 = vadd.f32 0.0, %v1120
        %v1122 = vpop.f32.mrf.mxu0
        %v1123 = vpop.f32.mrf.mxu0
        %v1124 = vpop.f32.mrf.mxu0
        %1125 = vdwg.mxu0
        %v1126 = vpack.c.bf16 %v1121, %v1121
        %v1128 = vunpack.c.l.b16 %v1126
        %v1129 = vpack.c.b16 %v1128, %v1128
        %1130 = vrot.lane.b32.xlu0 %v1129, 16
        %v1131 = vpop.permute.xlu0 %1130
        %vm1133 = vcmask 191616
        %1134 = vst.msk [vmem:[#allocation2] sm:$0xf] %vm1133, %v1131
        %1135 = vrot.lane.b32.xlu0 %v640, 104
        %v1136 = vpop.permute.xlu0 %1135
        %1137 = vrot.lane.b32.xlu0 %v707, 104
        %v1138 = vpop.permute.xlu0 %1137
        %v1140 = vsel %vm775, %v1136, 0
        %v1143 = vsel %vm775, %v1138, 0
        %1145 = vmatprep.subr.bf16.mxu0 0
        %1146 = vmatpush1.bf16.xpose.msra.mxu0 0
        %1147 = vmatprep.subr.bf16.mxu0 0
        %1148 = vmatpush1.bf16.xpose.msra.mxu0 0
        %1149 = vmatprep.subr.bf16.mxu0 0
        %1150 = vmatpush1.bf16.xpose.msra.mxu0 0
        %1151 = vmatprep.subr.bf16.mxu0 0
        %1152 = vmatpush1.bf16.xpose.msra.mxu0 0
        %1153 = vmatprep.subr.bf16.mxu0 0
        %1154 = vmatpush1.bf16.xpose.msra.mxu0 0
        %1155 = vmatprep.subr.bf16.mxu0 0
        %1156 = vmatpush1.bf16.xpose.msra.mxu0 0
        %1157 = vmatprep.subr.bf16.mxu0 0
        %1158 = vmatpush1.bf16.xpose.msra.mxu0 0
        %1159 = vmatprep.subr.bf16.mxu0 0
        %1160 = vmatpush1.bf16.xpose.msra.mxu0 %v1143
        %1161 = vmatprep.subr.bf16.mxu0 0
        %1162 = vmatpush2.bf16.xpose.msra.mxu0 0
        %1163 = vmatprep.subr.bf16.mxu0 0
        %1164 = vmatpush2.bf16.xpose.msra.mxu0 0
        %1165 = vmatprep.subr.bf16.mxu0 0
        %1166 = vmatpush2.bf16.xpose.msra.mxu0 0
        %1167 = vmatprep.subr.bf16.mxu0 0
        %1168 = vmatpush2.bf16.xpose.msra.mxu0 0
        %1169 = vmatprep.subr.bf16.mxu0 0
        %1170 = vmatpush2.bf16.xpose.msra.mxu0 0
        %1171 = vmatprep.subr.bf16.mxu0 0
        %1172 = vmatpush2.bf16.xpose.msra.mxu0 0
        %1173 = vmatprep.subr.bf16.mxu0 0
        %1174 = vmatpush2.bf16.xpose.msra.mxu0 0
        %1175 = vmatprep.subr.bf16.mxu0 0
        %1176 = vmatpush2.bf16.xpose.msra.mxu0 0
        %1177 = vmatprep.mubr.bf16.mxu0 0
        %1178 = vmatmul.mubr.bf16.gmra.mxu0 %v1140
        %v1179 = vpop.f32.mrf.mxu0
        %v1180 = vadd.f32 0.0, %v1179
        %v1181 = vpop.f32.mrf.mxu0
        %v1182 = vpop.f32.mrf.mxu0
        %v1183 = vpop.f32.mrf.mxu0
        %1184 = vdwg.mxu0
        %v1185 = vsel %vm775, %v1180, -inf
        %1186 = vmax.xlane.f32.xlu0 %v1185
        %v1187 = vpop.xlane.xlu0 %1186
        %v1188 = vsub.f32 %v1180, %v1187
        %v1189 = vmul.f32 %v1188, 1.442695
        %v1190 = vpow.pop %v1189
        %v1191 = vsel %vm775, %v1190, 0.0
        %1192 = vadd.xlane.f32.xlu0 %v1191
        %v1193 = vpop.xlane.xlu0 %1192
        %v1194 = vrcp.pop %v1193
        %v1195 = vmul.f32 %v1190, %v1194
        %v1196 = vld [vmem:[%s568] sm:$0xff]
        %v1197 = vmul.f32 %v1195, 0.25
        %v1198 = vadd.f32 %v1196, %v1197
        %1199 = vst.msk [vmem:[%s568] sm:$0xff] %vm775, %v1198
        %v1200 = vpack.c.bf16 %v1195, %v1195
        %1201 = vrot.lane.b32.xlu0 %v774, 104
        %v1202 = vpop.permute.xlu0 %1201
        %v1204 = vsel %vm775, %v1200, 0
        %v1207 = vsel %vm839, %v1202, 0
        %1209 = vmatprep.subr.bf16.mxu0 0
        %1210 = vmatpush1.bf16.msra.mxu0 0
        %1211 = vmatprep.subr.bf16.mxu0 0
        %1212 = vmatpush1.bf16.msra.mxu0 0
        %1213 = vmatprep.subr.bf16.mxu0 0
        %1214 = vmatpush1.bf16.msra.mxu0 0
        %1215 = vmatprep.subr.bf16.mxu0 0
        %1216 = vmatpush1.bf16.msra.mxu0 0
        %1217 = vmatprep.subr.bf16.mxu0 0
        %1218 = vmatpush1.bf16.msra.mxu0 0
        %1219 = vmatprep.subr.bf16.mxu0 0
        %1220 = vmatpush1.bf16.msra.mxu0 0
        %1221 = vmatprep.subr.bf16.mxu0 0
        %1222 = vmatpush1.bf16.msra.mxu0 0
        %1223 = vmatprep.subr.bf16.mxu0 0
        %1224 = vmatpush1.bf16.msra.mxu0 %v1207
        %1225 = vmatprep.subr.bf16.mxu0 0
        %1226 = vmatpush2.bf16.msra.mxu0 0
        %1227 = vmatprep.subr.bf16.mxu0 0
        %1228 = vmatpush2.bf16.msra.mxu0 0
        %1229 = vmatprep.subr.bf16.mxu0 0
        %1230 = vmatpush2.bf16.msra.mxu0 0
        %1231 = vmatprep.subr.bf16.mxu0 0
        %1232 = vmatpush2.bf16.msra.mxu0 0
        %1233 = vmatprep.subr.bf16.mxu0 0
        %1234 = vmatpush2.bf16.msra.mxu0 0
        %1235 = vmatprep.subr.bf16.mxu0 0
        %1236 = vmatpush2.bf16.msra.mxu0 0
        %1237 = vmatprep.subr.bf16.mxu0 0
        %1238 = vmatpush2.bf16.msra.mxu0 0
        %1239 = vmatprep.subr.bf16.mxu0 0
        %1240 = vmatpush2.bf16.msra.mxu0 0
        %1241 = vmatprep.mubr.bf16.mxu0 0
        %1242 = vmatmul.mubr.bf16.gmra.mxu0 %v1204
        %v1243 = vpop.f32.mrf.mxu0
        %v1244 = vadd.f32 0.0, %v1243
        %v1245 = vpop.f32.mrf.mxu0
        %v1246 = vpop.f32.mrf.mxu0
        %v1247 = vpop.f32.mrf.mxu0
        %1248 = vdwg.mxu0
        %v1249 = vpack.c.bf16 %v1244, %v1244
        %v1251 = vunpack.c.l.b16 %v1249
        %v1252 = vpack.c.b16 %v1251, %v1251
        %1253 = vrot.lane.b32.xlu0 %v1252, 24
        %v1254 = vpop.permute.xlu0 %1253
        %vm1256 = vcmask 257216
        %1257 = vst.msk [vmem:[#allocation2] sm:$0xf] %vm1256, %v1254
        %v1258 = vld [vmem:[#allocation2] sm:$0xf]
        %v1259 = vld [vmem:[#allocation14] sm:$0xf]
        %v1260 = vld [vmem:[#allocation14 + $0x4] sm:$0xf]
        %v1261 = vld [vmem:[#allocation14 + $0x8] sm:$0xf]
        %v1262 = vld [vmem:[#allocation14 + $0xc] sm:$0xf]
        %v1263 = vld [vmem:[%s10] sm:$0x1]
        %v1265 = vlaneseq
        %v1266 = vshrl.u32 %v1265, 7
        %v1267 = vsub.s32 0, %v1266
        %v1268 = vrot.slane %v1263, %v1267
        %v1274 = vunpack.c.l.b16 %v1259
        %v1275 = vunpack.c.l.b16 %v1260
        %v1276 = vunpack.c.l.b16 %v1261
        %v1277 = vunpack.c.l.b16 %v1262
        %v1278 = vpack.c.b16 %v1275, %v1274
        %v1279 = vpack.c.b16 %v1277, %v1276
        %v1283 = vsel %vm596, %v1258, 0
        %1285 = vmatprep.subr.bf16.mxu0 0
        %1286 = vmatpush1.bf16.msra.mxu0 0
        %1287 = vmatprep.subr.bf16.mxu0 0
        %1288 = vmatpush1.bf16.msra.mxu0 0
        %1289 = vmatprep.subr.bf16.mxu0 0
        %1290 = vmatpush1.bf16.msra.mxu0 0
        %1291 = vmatprep.subr.bf16.mxu0 0
        %1292 = vmatpush1.bf16.msra.mxu0 0
        %1293 = vmatprep.subr.bf16.mxu0 0
        %1294 = vmatpush1.bf16.msra.mxu0 0
        %1295 = vmatprep.subr.bf16.mxu0 0
        %1296 = vmatpush1.bf16.msra.mxu0 0
        %1297 = vmatprep.subr.bf16.mxu0 0
        %1298 = vmatpush1.bf16.msra.mxu0 %v1279
        %1299 = vmatprep.subr.bf16.mxu0 0
        %1300 = vmatpush1.bf16.msra.mxu0 %v1278
        %1301 = vmatprep.subr.bf16.mxu0 0
        %1302 = vmatpush2.bf16.msra.mxu0 0
        %1303 = vmatprep.subr.bf16.mxu0 0
        %1304 = vmatpush2.bf16.msra.mxu0 0
        %1305 = vmatprep.subr.bf16.mxu0 0
        %1306 = vmatpush2.bf16.msra.mxu0 0
        %1307 = vmatprep.subr.bf16.mxu0 0
        %1308 = vmatpush2.bf16.msra.mxu0 0
        %1309 = vmatprep.subr.bf16.mxu0 0
        %1310 = vmatpush2.bf16.msra.mxu0 0
        %1311 = vmatprep.subr.bf16.mxu0 0
        %1312 = vmatpush2.bf16.msra.mxu0 0
        %1313 = vmatprep.subr.bf16.mxu0 0
        %1314 = vmatpush2.bf16.msra.mxu0 0
        %1315 = vmatprep.subr.bf16.mxu0 0
        %1316 = vmatpush2.bf16.msra.mxu0 0
        %1317 = vmatprep.mubr.bf16.mxu0 0
        %1318 = vmatmul.mubr.bf16.gmra.mxu0 %v1283
        %v1319 = vpop.f32.mrf.mxu0
        %v1320 = vadd.f32 %v1268, %v1319
        %v1321 = vpop.f32.mrf.mxu0
        %v1322 = vpop.f32.mrf.mxu0
        %v1323 = vpop.f32.mrf.mxu0
        %1324 = vdwg.mxu0
        %1325 = vst.msk [vmem:[%s561] sm:$0xff] %vm596, %v1320
        %s1326 = sand.u32 %s292, 1
        %s1327 = scalar_lea.sflag [#allocation5], %s1326
        %s1328 = sand.u32 %s292, 1
        %s1329 = smul.addr %s1328, 8
        %s1330 = scalar_lea.vmem [#allocation15], %s1329
        %s1331 = sand.u32 %s318, 1
        %s1332 = scalar_lea.sflag [#allocation17], %s1331
        %s1333 = sand.u32 %s318, 1
        %s1334 = smul.addr %s1333, 8
        %s1335 = scalar_lea.vmem [#allocation16], %s1334
        // Predicated region
        $region93: #{tpu_custom_call.1} parent=63 // pred_check
          %p1336 = pneg %p302
        $region94: #{tpu_custom_call.1} parent=63 // pred_check_branch
          %1338 = sbr.rel (%p1336) target = $region96
        $region95: #{tpu_custom_call.1} parent=63 // pred_region
          %s1340 = ssub.s32 128, 128
          %1341 = vsyncadd %s1327, %s1340
          %s1342 = smul.addr %s38, 128
          %s1343 = scalar_lea.hbm %s11, %s1342
          %s1345 = sshll.u32 %s1330, 4
          %s1346 = int_to_ptr.vmem [resolvable:$true] %s1345
          %1348 = dma.vmem_to_hbm [thread:$0]  %s1346, 128, %s1343, %s1327
        $region96: #{tpu_custom_call.1} parent=63 // pred_fallthru
          _
        // Predicated region
        $region97: #{tpu_custom_call.1} parent=63 // pred_check
          %p1349 = pneg %p328
        $region98: #{tpu_custom_call.1} parent=63 // pred_check_branch
          %1351 = sbr.rel (%p1349) target = $region100
        $region99: #{tpu_custom_call.1} parent=63 // pred_region
          %s1353 = ssub.s32 128, 128
          %1354 = vsyncadd %s1332, %s1353
          %s1355 = smul.addr %s38, 128
          %s1356 = scalar_lea.hbm %s12, %s1355
          %s1358 = sshll.u32 %s1335, 4
          %s1359 = int_to_ptr.vmem [resolvable:$true] %s1358
          %1361 = dma.vmem_to_hbm [thread:$0]  %s1359, 128, %s1356, %s1332
        $region100: #{tpu_custom_call.1} parent=63 // pred_fallthru
          _
      $region64: #{tpu_custom_call.1} parent=5 // pred_fallthru
        _
      %p1362 = scmp.le.s32.totalorder 2, %s33
      // Predicated region
      $region101: #{tpu_custom_call.1} parent=5 // pred_check
        %p1363 = pneg %p1362
      $region102: #{tpu_custom_call.1} parent=5 // pred_check_branch
        %1365 = sbr.rel (%p1363) target = $region104
      $region103: #{tpu_custom_call.1} parent=5 // pred_region
        %s1366 = ssub.s32 %s33, 2
        // Predicated region
        $region105: #{tpu_custom_call.1} parent=103 // pred_check
          %p1367 = pneg %p308
        $region106: #{tpu_custom_call.1} parent=103 // pred_check_branch
          %1369 = sbr.rel (%p1367) target = $region108
        $region107: #{tpu_custom_call.1} parent=103 // pred_region
          %s1370 = sand.u32 %s293, 1
          %s1371 = scalar_lea.sflag [#allocation5], %s1370
          %s1372 = sand.u32 %s293, 1
          %s1373 = smul.addr %s1372, 8
          %s1374 = scalar_lea.vmem [#allocation15], %s1373
          %1375 = dma.done %s1371, 128
        $region108: #{tpu_custom_call.1} parent=103 // pred_fallthru
          _
        // Predicated region
        $region109: #{tpu_custom_call.1} parent=103 // pred_check
          %p1376 = pneg %p334
        $region110: #{tpu_custom_call.1} parent=103 // pred_check_branch
          %1378 = sbr.rel (%p1376) target = $region112
        $region111: #{tpu_custom_call.1} parent=103 // pred_region
          %s1379 = sand.u32 %s319, 1
          %s1380 = scalar_lea.sflag [#allocation17], %s1379
          %s1381 = sand.u32 %s319, 1
          %s1382 = smul.addr %s1381, 8
          %s1383 = scalar_lea.vmem [#allocation16], %s1382
          %1384 = dma.done %s1380, 128
        $region112: #{tpu_custom_call.1} parent=103 // pred_fallthru
          _
      $region104: #{tpu_custom_call.1} parent=5 // pred_fallthru
        _
    $region6: #{tpu_custom_call.1} parent=1 // loop_footer
      %s37 = sadd.s32 1, %s33
    $region7: #{tpu_custom_call.1} parent=1 // loop_footer_branch
      %32 = sbr.rel target = $region3
    $region8: #{tpu_custom_call.1} parent=1 // loop_exit
      _
    %1385 = vsyncpa [#allocation4], 1
    %s1386 = scalar_lea.sflag [#allocation4], 1
    %1387 = vsyncpa %s1386, 1
    %1388 = vsyncpa [#allocation7], 1
    %s1389 = scalar_lea.sflag [#allocation7], 1
    %1390 = vsyncpa %s1389, 1
    %1391 = vsyncpa [#allocation10], 1
    %1392 = vsyncpa [#allocation13], 1
    %1393 = vsyncpa [#allocation5], 1
    %s1394 = scalar_lea.sflag [#allocation5], 1
    %1395 = vsyncpa %s1394, 1
    %1396 = vsyncpa [#allocation17], 1
    %s1397 = scalar_lea.sflag [#allocation17], 1
    %1398 = vsyncpa %s1397, 1

</llo_original>
